<compile_context>
chip_gen: v7x
topology: tpu7x:2x2x1
jax: 0.10.0
libtpu: 0.0.40
codegen_flags: <defaults>
</compile_context>

<pallas_src>
import functools

import numpy as np
import jax
import jax.numpy as jnp
from jax.experimental import pallas as pl
from jax.experimental.pallas import tpu as pltpu

# ----------------------------------------------------------------------------
# Deterministic filter weights (exactly what kornia builds)
# ----------------------------------------------------------------------------
# kornia get_sobel_kernel2d() normalized by sum(|k|) == 8 (reference only)
_SOBEL_X = np.array([[-1.0, 0.0, 1.0],
                     [-2.0, 0.0, 2.0],
                     [-1.0, 0.0, 1.0]], dtype=np.float32) / 8.0
_SOBEL_Y = _SOBEL_X.T.copy()


def _gaussian_kernel1d(ksize: int, sigma: float) -> np.ndarray:
    x = np.arange(ksize, dtype=np.float64) - (ksize - 1) / 2.0
    g = np.exp(-(x * x) / (2.0 * sigma * sigma))
    return (g / g.sum()).astype(np.float32)


_GAUSS7 = _gaussian_kernel1d(7, 1.0)


def _folded_band_matrix(width: int, taps, border: str) -> np.ndarray:
    """(width, width) matrix M with out[..., c] = sum_w in[..., w] * M[w, c]:
    a 1-D cross-correlation along the last axis with the given taps and the
    boundary condition ('replicate' or torch-style 'reflect') folded in."""
    L = len(taps)
    r = L // 2
    m = np.zeros((width, width), dtype=np.float64)
    for c in range(width):
        for j in range(L):
            idx = c + j - r
            if border == "replicate":
                idx = min(max(idx, 0), width - 1)
            else:  # torch 'reflect' (no edge repeat); requires width > r
                if idx < 0:
                    idx = -idx
                elif idx > width - 1:
                    idx = 2 * (width - 1) - idx
            m[idx, c] += float(taps[j])
    return m.astype(np.float32)


# ----------------------------------------------------------------------------
# Fused Pallas kernel
# ----------------------------------------------------------------------------
def _harris_fused_kernel(k, gauss, x_ref, sobw_ref, gw_ref, out_ref):
    """x_ref:    (TN, H, W) image tile (native input dtype).
       sobw_ref: (W, 2W) fused horizontal Sobel band matrix [ [-1,0,1] | [1,2,1] ]
                 with the replicate boundary folded in.
       gw_ref:   (W, W)  horizontal 7-tap Gaussian band matrix, reflect folded in.
       out_ref:  (TN, H, W) Harris responses."""
    tn, H, W = x_ref.shape
    # Image passes the MXU twice (Sobel-h, Gauss-h): DEFAULT (single-pass bf16)
    # precision would not keep f32-level accuracy, so stay at HIGHEST.
    hp = jax.lax.Precision.HIGHEST

    x = x_ref[...].astype(jnp.float32)                 # cast in-kernel

    # --- Fused horizontal Sobel: ONE MXU pass over x.
    hm = jnp.dot(x.reshape(tn * H, W), sobw_ref[...],
                 precision=hp, preferred_element_type=jnp.float32)
    hm = hm.reshape(tn, H, 2 * W)
    hx = hm[:, :, :W]          # x (*) [-1, 0, 1]  (still needs vertical [1,2,1])
    hy = hm[:, :, W:]          # x (*) [ 1, 2, 1]  (still needs vertical [-1,0,1])

    # --- Vertical Sobel taps; replicate rows; 1/8 normalization folded in.
    hxp = jnp.concatenate([hx[:, 0:1], hx, hx[:, H - 1:H]], axis=1)
    hyp = jnp.concatenate([hy[:, 0:1], hy, hy[:, H - 1:H]], axis=1)
    dx = (hxp[:, 0:H] + 2.0 * hxp[:, 1:H + 1] + hxp[:, 2:H + 2]) * 0.125
    dy = (hyp[:, 2:H + 2] - hyp[:, 0:H]) * 0.125

    # --- Gradient products, stacked so the 7x7 blur runs ONCE over all three.
    p = jnp.concatenate([dx * dx, dy * dy, dx * dy], axis=0)      # (3*TN, H, W)

    # --- 7x7 Gaussian blur (separable).  Horizontal (reflect folded into gw)
    # on the MXU; vertical with reflect rows + symmetric-tap pairing.
    bh = jnp.dot(p.reshape(3 * tn * H, W), gw_ref[...],
                 precision=hp, preferred_element_type=jnp.float32)
    bh = bh.reshape(3 * tn, H, W)
    bp = jnp.concatenate(
        [bh[:, 3:4], bh[:, 2:3], bh[:, 1:2], bh,
         bh[:, H - 2:H - 1], bh[:, H - 3:H - 2], bh[:, H - 4:H - 3]],
        axis=1)                                                    # (3*TN, H+6, W)
    blur = gauss[3] * bp[:, 3:3 + H]
    for i in range(3):          # g[i] == g[6-i]: pre-add symmetric row pairs
        blur = blur + gauss[i] * (bp[:, i:i + H] + bp[:, 6 - i:6 - i + H])

    sdx2 = blur[0:tn]
    sdy2 = blur[tn:2 * tn]
    sdxy = blur[2 * tn:3 * tn]

    det_m = sdx2 * sdy2 - sdxy * sdxy
    trace_m = sdx2 + sdy2
    out_ref[...] = (det_m - k * (trace_m * trace_m)).astype(out_ref.dtype)


# ----------------------------------------------------------------------------
# Wrapper
# ----------------------------------------------------------------------------
def _pick_tile_n(n: int, h: int, w: int) -> int:
    """Largest divisor of n giving >= min(n, 8) grid steps and <= ~512 KiB of
    f32 image data per step.  Divisor => no wrapper-side padding / result
    slicing; small blocks => per-step live set stays far under v7x's 64 MiB
    VMEM and >= 4 steps per TensorCore keep the pipeline / dual-TC busy."""
    bytes_per_image = h * w * 4
    cap = max(1, (512 * 1024) // bytes_per_image)
    cap = min(cap, max(1, n // min(n, 8)), n)
    tile_n = 1
    for d in range(1, cap + 1):
        if n % d == 0:
            tile_n = d
    return tile_n


def harris_response(x, k=0.04, grads_mode="sobel", sigmas=None):
    if grads_mode != "sobel":
        # TODO(synk): 'diff' grads_mode (plain central differences) not implemented.
        raise NotImplementedError("only grads_mode='sobel' is implemented")
    B, C, H, W = x.shape
    if H < 4 or W < 4:
        raise ValueError("reflect padding of the 7x7 Gaussian requires H, W >= 4")
    if W > 1024:
        # TODO(synk): width-tile with a 3/7-column halo (or a pltpu.roll lane-shift
        # formulation) instead of dense (W, W) band matrices for very wide images.
        raise NotImplementedError("W > 1024 not supported by the dense band-matrix path")
    # TODO(synk): row-tile (with halos) images whose single-image block exceeds VMEM.
    # TODO(synk): for W < 128, pack several images along the lane axis
    # (block-diagonal band matrix) so stores are lane-dense.

    N = B * C
    out_dtype = x.dtype if jnp.issubdtype(x.dtype, jnp.floating) else jnp.float32
    xr = x.reshape(N, H, W)        # native dtype; f32 cast happens in-kernel

    tile_n = _pick_tile_n(N, H, W)
    grid = (N // tile_n,)

    # Horizontal band matrices with the boundary condition folded in (constant
    # across grid steps, so Pallas only DMAs them once).
    dxw = _folded_band_matrix(W, [-1.0, 0.0, 1.0], "replicate")
    sxw = _folded_band_matrix(W, [1.0, 2.0, 1.0], "replicate")
    sobw = jnp.asarray(np.concatenate([dxw, sxw], axis=1))        # (W, 2W)
    gw = jnp.asarray(_folded_band_matrix(W, _GAUSS7, "reflect"))  # (W, W)

    gauss_taps = tuple(float(v) for v in _GAUSS7)

    out = pl.pallas_call(
        functools.partial(_harris_fused_kernel, float(k), gauss_taps),
        out_shape=jax.ShapeDtypeStruct((N, H, W), out_dtype),
        grid=grid,
        in_specs=[
            pl.BlockSpec((tile_n, H, W), lambda n: (n, 0, 0)),
            pl.BlockSpec((W, 2 * W), lambda n: (0, 0)),
            pl.BlockSpec((W, W), lambda n: (0, 0)),
        ],
        out_specs=pl.BlockSpec((tile_n, H, W), lambda n: (n, 0, 0)),
        compiler_params=pltpu.CompilerParams(
            dimension_semantics=("parallel",),
            vmem_limit_bytes=48 * 1024 * 1024,   # < v7x 64 MiB physical; blocks are small
        ),
    )(xr, sobw, gw)

    scores = out.reshape(B, C, H, W)
    if sigmas is not None:
        scores = scores * (sigmas.astype(scores.dtype) ** 4).reshape(-1, 1, 1, 1)
    return scores


class CornerHarris:
    """Mirror of kornia's CornerHarris module (buffer k registered at init)."""

    def __init__(self, k=0.04, grads_mode="sobel"):
        self.k = float(k)
        self.grads_mode = grads_mode

    def __call__(self, x, sigmas=None):
        return harris_response(x, self.k, self.grads_mode, sigmas)


# ----------------------------------------------------------------------------
# Pure-JAX reference (direct 2D convolutions, same math) for a sanity check.
# ----------------------------------------------------------------------------
def _reference(x, k=0.04):
    B, C, H, W = x.shape
    xf = x.astype(jnp.float32).reshape(B * C, H, W)
    xp = jnp.pad(xf, ((0, 0), (1, 1), (1, 1)), mode="edge")
    dx = sum(float(_SOBEL_X[u, v]) * xp[:, u:u + H, v:v + W]
             for u in range(3) for v in range(3))
    dy = sum(float(_SOBEL_Y[u, v]) * xp[:, u:u + H, v:v + W]
             for u in range(3) for v in range(3))

    def blur(a):
        ap = jnp.pad(a, ((0, 0), (3, 3), (3, 3)), mode="reflect")
        tmp = sum(float(_GAUSS7[j]) * ap[:, :, j:j + W] for j in range(7))
        return sum(float(_GAUSS7[i]) * tmp[:, i:i + H, :] for i in range(7))

    dx2, dy2, dxy = blur(dx * dx), blur(dy * dy), blur(dx * dy)
    det_m = dx2 * dy2 - dxy * dxy
    trace_m = dx2 + dy2
    return (det_m - k * trace_m ** 2).reshape(B, C, H, W)


if __name__ == "__main__":
    key = jax.random.PRNGKey(0)
    x = jax.random.uniform(key, (2, 4, 16, 16), dtype=jnp.float32)

    detector = CornerHarris(k=0.04, grads_mode="sobel")
    out = jax.block_until_ready(detector(x))
    assert out.shape == (2, 4, 16, 16), out.shape

    ref = jax.block_until_ready(_reference(x, 0.04))
    err = float(jnp.max(jnp.abs(out - ref)))
    assert err < 1e-4, err

    print("KERNEL_OK")
</pallas_src>

<mosaic_0001>
module attributes {stable_mosaic.version = 11 : i64} {
  func.func @_harris_fused_kernel(%arg0: i32, %arg1: memref<1x16x16xf32, #tpu.memory_space<vmem>>, %arg2: memref<16x32xf32, #tpu.memory_space<vmem>>, %arg3: memref<16x16xf32, #tpu.memory_space<vmem>>, %arg4: memref<1x16x16xf32, #tpu.memory_space<vmem>>) attributes {dimension_semantics = [#tpu.dimension_semantics<parallel>], iteration_bounds = array<i64: 8>, scalar_prefetch = 0 : i64, scratch_operands = 0 : i64, tpu.core_type = #tpu.core_type<tc>, window_params = [{transform_indices = @transform_0, window_bounds = array<i64: 1, 16, 16>}, {pipeline_mode = #tpu.pipeline_mode<synchronous>, transform_indices = @transform_1, window_bounds = array<i64: 16, 32>}, {pipeline_mode = #tpu.pipeline_mode<synchronous>, transform_indices = @transform_2, window_bounds = array<i64: 16, 16>}, {transform_indices = @transform_3, window_bounds = array<i64: 1, 16, 16>}]} {
    %c0 = arith.constant 0 : index
    %c0_0 = arith.constant 0 : index
    %c0_1 = arith.constant 0 : index
    %0 = vector.load %arg1[%c0, %c0_0, %c0_1] : memref<1x16x16xf32, #tpu.memory_space<vmem>>, vector<1x16x16xf32>
    %1 = vector.shape_cast %0 : vector<1x16x16xf32> to vector<16x16xf32>
    %c0_2 = arith.constant 0 : index
    %c0_3 = arith.constant 0 : index
    %2 = vector.load %arg2[%c0_2, %c0_3] : memref<16x32xf32, #tpu.memory_space<vmem>>, vector<16x32xf32>
    %cst = arith.constant dense<0.000000e+00> : vector<16x32xf32>
    %3 = tpu.matmul %1, %2, %cst {dimension_numbers = #tpu.dot_dimension_numbers<[1], [0], [0], [1], [0, 0, 1, 1], [], []>, precision = #tpu.contract_precision<fp32>} : vector<16x16xf32>, vector<16x32xf32>, vector<16x32xf32> -> vector<16x32xf32>
    %4 = vector.shape_cast %3 : vector<16x32xf32> to vector<1x16x32xf32>
    %5 = vector.extract_strided_slice %4 {offsets = [0, 0, 0], sizes = [1, 16, 16], strides = [1, 1, 1]} : vector<1x16x32xf32> to vector<1x16x16xf32>
    %6 = vector.extract_strided_slice %4 {offsets = [0, 0, 16], sizes = [1, 16, 16], strides = [1, 1, 1]} : vector<1x16x32xf32> to vector<1x16x16xf32>
    %7 = vector.extract_strided_slice %5 {offsets = [0, 0, 0], sizes = [1, 1, 16], strides = [1, 1, 1]} : vector<1x16x16xf32> to vector<1x1x16xf32>
    %8 = vector.extract_strided_slice %5 {offsets = [0, 15, 0], sizes = [1, 1, 16], strides = [1, 1, 1]} : vector<1x16x16xf32> to vector<1x1x16xf32>
    %9 = tpu.concatenate %7, %5, %8 in 1 : vector<1x1x16xf32>, vector<1x16x16xf32>, vector<1x1x16xf32> -> vector<1x18x16xf32>
    %10 = vector.extract_strided_slice %6 {offsets = [0, 0, 0], sizes = [1, 1, 16], strides = [1, 1, 1]} : vector<1x16x16xf32> to vector<1x1x16xf32>
    %11 = vector.extract_strided_slice %6 {offsets = [0, 15, 0], sizes = [1, 1, 16], strides = [1, 1, 1]} : vector<1x16x16xf32> to vector<1x1x16xf32>
    %12 = tpu.concatenate %10, %6, %11 in 1 : vector<1x1x16xf32>, vector<1x16x16xf32>, vector<1x1x16xf32> -> vector<1x18x16xf32>
    %13 = vector.extract_strided_slice %9 {offsets = [0, 0, 0], sizes = [1, 16, 16], strides = [1, 1, 1]} : vector<1x18x16xf32> to vector<1x16x16xf32>
    %14 = vector.extract_strided_slice %9 {offsets = [0, 1, 0], sizes = [1, 16, 16], strides = [1, 1, 1]} : vector<1x18x16xf32> to vector<1x16x16xf32>
    %cst_4 = arith.constant 2.000000e+00 : f32
    %15 = vector.broadcast %cst_4 : f32 to vector<1x16x16xf32>
    %16 = arith.mulf %15, %14 : vector<1x16x16xf32>
    %17 = arith.addf %13, %16 : vector<1x16x16xf32>
    %18 = vector.extract_strided_slice %9 {offsets = [0, 2, 0], sizes = [1, 16, 16], strides = [1, 1, 1]} : vector<1x18x16xf32> to vector<1x16x16xf32>
    %19 = arith.addf %17, %18 : vector<1x16x16xf32>
    %cst_5 = arith.constant 1.250000e-01 : f32
    %20 = vector.broadcast %cst_5 : f32 to vector<1x16x16xf32>
    %21 = arith.mulf %19, %20 : vector<1x16x16xf32>
    %22 = vector.extract_strided_slice %12 {offsets = [0, 2, 0], sizes = [1, 16, 16], strides = [1, 1, 1]} : vector<1x18x16xf32> to vector<1x16x16xf32>
    %23 = vector.extract_strided_slice %12 {offsets = [0, 0, 0], sizes = [1, 16, 16], strides = [1, 1, 1]} : vector<1x18x16xf32> to vector<1x16x16xf32>
    %24 = arith.subf %22, %23 : vector<1x16x16xf32>
    %cst_6 = arith.constant 1.250000e-01 : f32
    %25 = vector.broadcast %cst_6 : f32 to vector<1x16x16xf32>
    %26 = arith.mulf %24, %25 : vector<1x16x16xf32>
    %27 = arith.mulf %21, %21 : vector<1x16x16xf32>
    %28 = arith.mulf %26, %26 : vector<1x16x16xf32>
    %29 = arith.mulf %21, %26 : vector<1x16x16xf32>
    %30 = tpu.concatenate %27, %28, %29 in 0 : vector<1x16x16xf32>, vector<1x16x16xf32>, vector<1x16x16xf32> -> vector<3x16x16xf32>
    %31 = vector.shape_cast %30 : vector<3x16x16xf32> to vector<48x16xf32>
    %c0_7 = arith.constant 0 : index
    %c0_8 = arith.constant 0 : index
    %32 = vector.load %arg3[%c0_7, %c0_8] : memref<16x16xf32, #tpu.memory_space<vmem>>, vector<16x16xf32>
    %cst_9 = arith.constant dense<0.000000e+00> : vector<48x16xf32>
    %33 = tpu.matmul %31, %32, %cst_9 {dimension_numbers = #tpu.dot_dimension_numbers<[1], [0], [0], [1], [0, 0, 1, 1], [], []>, precision = #tpu.contract_precision<fp32>} : vector<48x16xf32>, vector<16x16xf32>, vector<48x16xf32> -> vector<48x16xf32>
    %34 = vector.shape_cast %33 : vector<48x16xf32> to vector<3x16x16xf32>
    %35 = vector.extract_strided_slice %34 {offsets = [0, 3, 0], sizes = [3, 1, 16], strides = [1, 1, 1]} : vector<3x16x16xf32> to vector<3x1x16xf32>
    %36 = vector.extract_strided_slice %34 {offsets = [0, 2, 0], sizes = [3, 1, 16], strides = [1, 1, 1]} : vector<3x16x16xf32> to vector<3x1x16xf32>
    %37 = vector.extract_strided_slice %34 {offsets = [0, 1, 0], sizes = [3, 1, 16], strides = [1, 1, 1]} : vector<3x16x16xf32> to vector<3x1x16xf32>
    %38 = vector.extract_strided_slice %34 {offsets = [0, 14, 0], sizes = [3, 1, 16], strides = [1, 1, 1]} : vector<3x16x16xf32> to vector<3x1x16xf32>
    %39 = vector.extract_strided_slice %34 {offsets = [0, 13, 0], sizes = [3, 1, 16], strides = [1, 1, 1]} : vector<3x16x16xf32> to vector<3x1x16xf32>
    %40 = vector.extract_strided_slice %34 {offsets = [0, 12, 0], sizes = [3, 1, 16], strides = [1, 1, 1]} : vector<3x16x16xf32> to vector<3x1x16xf32>
    %41 = tpu.concatenate %35, %36, %37, %34, %38, %39, %40 in 1 : vector<3x1x16xf32>, vector<3x1x16xf32>, vector<3x1x16xf32>, vector<3x16x16xf32>, vector<3x1x16xf32>, vector<3x1x16xf32>, vector<3x1x16xf32> -> vector<3x22x16xf32>
    %42 = vector.extract_strided_slice %41 {offsets = [0, 3, 0], sizes = [3, 16, 16], strides = [1, 1, 1]} : vector<3x22x16xf32> to vector<3x16x16xf32>
    %cst_10 = arith.constant 0.399050266 : f32
    %43 = vector.broadcast %cst_10 : f32 to vector<3x16x16xf32>
    %44 = arith.mulf %43, %42 : vector<3x16x16xf32>
    %45 = vector.extract_strided_slice %41 {offsets = [0, 0, 0], sizes = [3, 16, 16], strides = [1, 1, 1]} : vector<3x22x16xf32> to vector<3x16x16xf32>
    %46 = vector.extract_strided_slice %41 {offsets = [0, 6, 0], sizes = [3, 16, 16], strides = [1, 1, 1]} : vector<3x22x16xf32> to vector<3x16x16xf32>
    %47 = arith.addf %45, %46 : vector<3x16x16xf32>
    %cst_11 = arith.constant 0.00443304796 : f32
    %48 = vector.broadcast %cst_11 : f32 to vector<3x16x16xf32>
    %49 = arith.mulf %48, %47 : vector<3x16x16xf32>
    %50 = arith.addf %44, %49 : vector<3x16x16xf32>
    %51 = vector.extract_strided_slice %41 {offsets = [0, 1, 0], sizes = [3, 16, 16], strides = [1, 1, 1]} : vector<3x22x16xf32> to vector<3x16x16xf32>
    %52 = vector.extract_strided_slice %41 {offsets = [0, 5, 0], sizes = [3, 16, 16], strides = [1, 1, 1]} : vector<3x22x16xf32> to vector<3x16x16xf32>
    %53 = arith.addf %51, %52 : vector<3x16x16xf32>
    %cst_12 = arith.constant 0.0540055819 : f32
    %54 = vector.broadcast %cst_12 : f32 to vector<3x16x16xf32>
    %55 = arith.mulf %54, %53 : vector<3x16x16xf32>
    %56 = arith.addf %50, %55 : vector<3x16x16xf32>
    %57 = vector.extract_strided_slice %41 {offsets = [0, 2, 0], sizes = [3, 16, 16], strides = [1, 1, 1]} : vector<3x22x16xf32> to vector<3x16x16xf32>
    %58 = vector.extract_strided_slice %41 {offsets = [0, 4, 0], sizes = [3, 16, 16], strides = [1, 1, 1]} : vector<3x22x16xf32> to vector<3x16x16xf32>
    %59 = arith.addf %57, %58 : vector<3x16x16xf32>
    %cst_13 = arith.constant 0.242036223 : f32
    %60 = vector.broadcast %cst_13 : f32 to vector<3x16x16xf32>
    %61 = arith.mulf %60, %59 : vector<3x16x16xf32>
    %62 = arith.addf %56, %61 : vector<3x16x16xf32>
    %63 = vector.extract_strided_slice %62 {offsets = [0, 0, 0], sizes = [1, 16, 16], strides = [1, 1, 1]} : vector<3x16x16xf32> to vector<1x16x16xf32>
    %64 = vector.extract_strided_slice %62 {offsets = [1, 0, 0], sizes = [1, 16, 16], strides = [1, 1, 1]} : vector<3x16x16xf32> to vector<1x16x16xf32>
    %65 = vector.extract_strided_slice %62 {offsets = [2, 0, 0], sizes = [1, 16, 16], strides = [1, 1, 1]} : vector<3x16x16xf32> to vector<1x16x16xf32>
    %66 = arith.mulf %63, %64 : vector<1x16x16xf32>
    %67 = arith.mulf %65, %65 : vector<1x16x16xf32>
    %68 = arith.subf %66, %67 : vector<1x16x16xf32>
    %69 = arith.addf %63, %64 : vector<1x16x16xf32>
    %70 = arith.mulf %69, %69 : vector<1x16x16xf32>
    %cst_14 = arith.constant 4.000000e-02 : f32
    %71 = vector.broadcast %cst_14 : f32 to vector<1x16x16xf32>
    %72 = arith.mulf %71, %70 : vector<1x16x16xf32>
    %73 = arith.subf %68, %72 : vector<1x16x16xf32>
    %c0_15 = arith.constant 0 : index
    %c0_16 = arith.constant 0 : index
    %c0_17 = arith.constant 0 : index
    %74 = vector.load %arg4[%c0_15, %c0_16, %c0_17] : memref<1x16x16xf32, #tpu.memory_space<vmem>>, vector<1x16x16xf32>
    tpu.vector_store %arg4[%c0_15, %c0_16, %c0_17], %73 {strides = array<i32>} : memref<1x16x16xf32, #tpu.memory_space<vmem>>, vector<1x16x16xf32>,
    return
  }
  func.func @transform_0(%arg0: i32) -> (i32, i32, i32) {
    %c0_i32 = arith.constant 0 : i32
    %c0_i32_0 = arith.constant 0 : i32
    %c0_i32_1 = arith.constant 0 : i32
    return %arg0, %c0_i32, %c0_i32_0 : i32, i32, i32
  }
  func.func @transform_1(%arg0: i32) -> (i32, i32) {
    %c0_i32 = arith.constant 0 : i32
    %c0_i32_0 = arith.constant 0 : i32
    %c0_i32_1 = arith.constant 0 : i32
    return %c0_i32, %c0_i32_0 : i32, i32
  }
  func.func @transform_2(%arg0: i32) -> (i32, i32) {
    %c0_i32 = arith.constant 0 : i32
    %c0_i32_0 = arith.constant 0 : i32
    %c0_i32_1 = arith.constant 0 : i32
    return %c0_i32, %c0_i32_0 : i32, i32
  }
  func.func @transform_3(%arg0: i32) -> (i32, i32, i32) {
    %c0_i32 = arith.constant 0 : i32
    %c0_i32_0 = arith.constant 0 : i32
    %c0_i32_1 = arith.constant 0 : i32
    return %arg0, %c0_i32, %c0_i32_0 : i32, i32, i32
  }
}

</mosaic_0001>

<llo_original>
// kernel: tpu_custom_call.1
$region0: #{tpu_custom_call.1}
  #allocation0 [shape = 'u32[]', space=smem, size = 0x4, offset = 0x4, fixed_abs, tag = 'smem constant byte address 0x4 - core index']
  #allocation1 [shape = 'u32[144,128]{1,0:T(1,128)}', space=vmem, size = 0x12000, scoped, tag = 'internal scratch']
  %s0 = inlined_call_operand.hbm [shape: f32[8,16,16], index: 0, kind: input, shape index: {}]
  %s1 = inlined_call_operand.hbm [shape: f32[16,32], index: 1, kind: input, shape index: {}]
  %s2 = inlined_call_operand.hbm [shape: f32[16,16], index: 2, kind: input, shape index: {}]
  %s3 = inlined_call_operand.hbm [shape: f32[8,16,16], index: 3, kind: output, shape index: {}]
  %s4 = sld [smem:[#allocation0]]
  $region57: #{tpu_custom_call.1} parent=0
    _
  %s6 = ssub.s32 1, %s4
  %s7 = scalar_select 0, %s6, %s4
  $region1: #{tpu_custom_call.1} parent=0
    #allocation2 [shape = 'u8[16384]{0}', space=vmem, size = 0x4000, scoped, tag = 'input window, operand 0']
    #allocation3 [shape = 's32[2]{0}', space=sflag, size = 0x8, scoped, tag = 'scoped memory for tpu_custom_call.1']
    #allocation4 [shape = 's32[2]{0}', space=sflag, size = 0x8, scoped, tag = 'scoped memory for tpu_custom_call.1']
    #allocation5 [shape = 'u8[8192]{0}', space=vmem, size = 0x2000, scoped, tag = 'input window, operand 1, single buffered']
    #allocation6 [shape = 's32[1]{0}', space=sflag, size = 0x4, scoped, tag = 'scoped memory for tpu_custom_call.1']
    #allocation7 [shape = 'u8[8192]{0}', space=vmem, size = 0x2000, scoped, tag = 'input window, operand 2, single buffered']
    #allocation8 [shape = 'u8[16384]{0}', space=vmem, size = 0x4000, scoped, tag = 'output window, operand 0']
    %8 = vsyncpa [#allocation3], 0
    %s9 = scalar_lea.sflag [#allocation3], 1
    %10 = vsyncpa %s9, 0
    %11 = vsyncpa [#allocation6], 0
    %12 = vsyncpa [#allocation4], 0
    %s13 = scalar_lea.sflag [#allocation4], 1
    %14 = vsyncpa %s13, 0
    loop: start=0, step=1, limit=10
    $region2: #{tpu_custom_call.1} parent=1 // loop_pre_header
      _
    $region3: #{tpu_custom_call.1} parent=1 // loop_header
      %s16 = sphi 0, %s20
      %p17 = scmp.ge.s32.totalorder %s16, 10
      %s26 = sphi 0, %s28
      %s29 = sphi 0, %s26
      %s30 = sphi 0, %s29
      %s46 = sphi 0, %s30
      %s50 = sphi 0, %s50
      %s52 = sphi 0, %s50
      %s53 = sphi 0, %s52
      %s67 = sphi 0, %s53
      %s71 = sphi 0, %s71
      %s73 = sphi 0, %s71
      %s74 = sphi 0, %s73
      %s88 = sphi 0, %s74
      %s94 = sphi 0, %s96
      %s97 = sphi 0, %s94
      %s98 = sphi 0, %s97
      %s114 = sphi 0, %s98
    $region4: #{tpu_custom_call.1} parent=1 // loop_header_branch
      %19 = sbr.rel (%p17) target = $region8
    $region5: #{tpu_custom_call.1} parent=1 // loop_body
      %s21 = ssub.s32 %s16, 1
      %s22 = ssub.s32 %s16, 2
      %s23 = sadd.s32 %s16, 1
      %s24 = ssub.s32 %s16, %s23
      %p25 = scmp.eq.s32.totalorder %s24, 0
      %s27 = sadd.s32 %s26, 1
      %s28 = scalar_select %p25, %s26, %s27
      %p31 = pneg %p25
      %p32 = scmp.eq.s32.totalorder %s16, 7
      %p33 = por %p31, %p32
      %p34 = scmp.ne.s32.totalorder %s26, %s29
      %p35 = scmp.eq.s32.totalorder %s16, 0
      %p36 = por %p34, %p35
      %p37 = scmp.ne.s32.totalorder %s26, %s29
      %p38 = scmp.eq.s32.totalorder %s21, 7
      %p39 = por %p37, %p38
      %p40 = scmp.ne.s32.totalorder %s29, %s30
      %p41 = scmp.eq.s32.totalorder %s21, 0
      %p42 = por %p40, %p41
      %p43 = scmp.ne.s32.totalorder %s29, %s30
      %p44 = scmp.eq.s32.totalorder %s22, 7
      %p45 = por %p43, %p44
      %p47 = scmp.ne.s32.totalorder %s30, %s46
      %p48 = scmp.eq.s32.totalorder %s22, 0
      %p49 = por %p47, %p48
      %s51 = sadd.s32 %s50, 1
      %p54 = scmp.eq.s32.totalorder %s16, 7
      %p55 = scmp.ne.s32.totalorder %s50, %s52
      %p56 = scmp.eq.s32.totalorder %s16, 0
      %p57 = por %p55, %p56
      %p58 = scmp.ne.s32.totalorder %s50, %s52
      %p59 = scmp.eq.s32.totalorder %s21, 7
      %p60 = por %p58, %p59
      %p61 = scmp.ne.s32.totalorder %s52, %s53
      %p62 = scmp.eq.s32.totalorder %s21, 0
      %p63 = por %p61, %p62
      %p64 = scmp.ne.s32.totalorder %s52, %s53
      %p65 = scmp.eq.s32.totalorder %s22, 7
      %p66 = por %p64, %p65
      %p68 = scmp.ne.s32.totalorder %s53, %s67
      %p69 = scmp.eq.s32.totalorder %s22, 0
      %p70 = por %p68, %p69
      %s72 = sadd.s32 %s71, 1
      %p75 = scmp.eq.s32.totalorder %s16, 7
      %p76 = scmp.ne.s32.totalorder %s71, %s73
      %p77 = scmp.eq.s32.totalorder %s16, 0
      %p78 = por %p76, %p77
      %p79 = scmp.ne.s32.totalorder %s71, %s73
      %p80 = scmp.eq.s32.totalorder %s21, 7
      %p81 = por %p79, %p80
      %p82 = scmp.ne.s32.totalorder %s73, %s74
      %p83 = scmp.eq.s32.totalorder %s21, 0
      %p84 = por %p82, %p83
      %p85 = scmp.ne.s32.totalorder %s73, %s74
      %p86 = scmp.eq.s32.totalorder %s22, 7
      %p87 = por %p85, %p86
      %p89 = scmp.ne.s32.totalorder %s74, %s88
      %p90 = scmp.eq.s32.totalorder %s22, 0
      %p91 = por %p89, %p90
      %s92 = ssub.s32 %s16, %s23
      %p93 = scmp.eq.s32.totalorder %s92, 0
      %s95 = sadd.s32 %s94, 1
      %s96 = scalar_select %p93, %s94, %s95
      %p99 = pneg %p93
      %p100 = scmp.eq.s32.totalorder %s16, 7
      %p101 = por %p99, %p100
      %p102 = scmp.ne.s32.totalorder %s94, %s97
      %p103 = scmp.eq.s32.totalorder %s16, 0
      %p104 = por %p102, %p103
      %p105 = scmp.ne.s32.totalorder %s94, %s97
      %p106 = scmp.eq.s32.totalorder %s21, 7
      %p107 = por %p105, %p106
      %p108 = scmp.ne.s32.totalorder %s97, %s98
      %p109 = scmp.eq.s32.totalorder %s21, 0
      %p110 = por %p108, %p109
      %p111 = scmp.ne.s32.totalorder %s97, %s98
      %p112 = scmp.eq.s32.totalorder %s22, 7
      %p113 = por %p111, %p112
      %p115 = scmp.ne.s32.totalorder %s98, %s114
      %p116 = scmp.eq.s32.totalorder %s22, 0
      %p117 = por %p115, %p116
      %p118 = scmp.le.s32.totalorder 1, %s16
      %p119 = scmp.lt.s32.totalorder %s16, 9
      %p120 = pnand %p118, %p119
      %p121 = pneg %p120
      // Predicated region
      $region9: #{tpu_custom_call.1} parent=5 // pred_check
        _
      $region10: #{tpu_custom_call.1} parent=5 // pred_check_branch
        %123 = sbr.rel (%p120) target = $region12
      $region11: #{tpu_custom_call.1} parent=5 // pred_region
        %s124 = ssub.s32 %s16, 1
        // Predicated region
        $region13: #{tpu_custom_call.1} parent=11 // pred_check
          %p125 = pneg %p63
        $region14: #{tpu_custom_call.1} parent=11 // pred_check_branch
          %127 = sbr.rel (%p125) target = $region16
        $region15: #{tpu_custom_call.1} parent=11 // pred_region
          %s129 = ssub.s32 256, 256
          %130 = vsyncadd [#allocation6], %s129
          %s131 = sshll.u32 [#allocation5], 4
          %s132 = int_to_ptr.vmem [resolvable:$true] %s131
          %137 = dma.hbm_to_vmem [thread:$0]  %s1, 256, %s132, [#allocation6], 128, 128, 8
        $region16: #{tpu_custom_call.1} parent=11 // pred_fallthru
          _
        // Predicated region
        $region17: #{tpu_custom_call.1} parent=11 // pred_check
          %p138 = pneg %p84
        $region18: #{tpu_custom_call.1} parent=11 // pred_check_branch
          %140 = sbr.rel (%p138) target = $region20
        $region19: #{tpu_custom_call.1} parent=11 // pred_region
          %s142 = ssub.s32 256, 256
          %143 = vsyncadd [#allocation6], %s142
          %s144 = sshll.u32 [#allocation7], 4
          %s145 = int_to_ptr.vmem [resolvable:$true] %s144
          %150 = dma.hbm_to_vmem [thread:$0]  %s2, 256, %s145, [#allocation6], 128, 128, 8
        $region20: #{tpu_custom_call.1} parent=11 // pred_fallthru
          _
      $region12: #{tpu_custom_call.1} parent=5 // pred_fallthru
        _
      %p151 = scmp.lt.s32.totalorder %s16, 8
      // Predicated region
      $region21: #{tpu_custom_call.1} parent=5 // pred_check
        %p152 = pneg %p151
      $region22: #{tpu_custom_call.1} parent=5 // pred_check_branch
        %154 = sbr.rel (%p152) target = $region24
      $region23: #{tpu_custom_call.1} parent=5 // pred_region
        // Predicated region
        $region25: #{tpu_custom_call.1} parent=23 // pred_check
          %p155 = pneg %p36
        $region26: #{tpu_custom_call.1} parent=23 // pred_check_branch
          %157 = sbr.rel (%p155) target = $region28
        $region27: #{tpu_custom_call.1} parent=23 // pred_region
          %s158 = sand.u32 %s26, 1
          %s159 = scalar_lea.sflag [#allocation3], %s158
          %s160 = sand.u32 %s26, 1
          %s161 = smul.addr %s160, 16
          %s162 = scalar_lea.vmem [#allocation2], %s161
          %s164 = ssub.s32 256, 256
          %165 = vsyncadd %s159, %s164
          %s166 = smul.addr %s16, 2
          %s167 = smul.addr %s166, 128
          %s168 = scalar_lea.hbm %s0, %s167
          %s169 = sshll.u32 %s162, 4
          %s170 = int_to_ptr.vmem [resolvable:$true] %s169
          %175 = dma.hbm_to_vmem [thread:$0]  %s168, 256, %s170, %s159, 128, 128, 8
        $region28: #{tpu_custom_call.1} parent=23 // pred_fallthru
          _
      $region24: #{tpu_custom_call.1} parent=5 // pred_fallthru
        _
      %p176 = scmp.le.s32.totalorder 1, %s16
      %p177 = scmp.lt.s32.totalorder %s16, 9
      %p178 = pnand %p176, %p177
      %p179 = pneg %p178
      // Predicated region
      $region29: #{tpu_custom_call.1} parent=5 // pred_check
        _
      $region30: #{tpu_custom_call.1} parent=5 // pred_check_branch
        %181 = sbr.rel (%p178) target = $region32
      $region31: #{tpu_custom_call.1} parent=5 // pred_region
        %s182 = ssub.s32 %s16, 1
        %s183 = sand.u32 %s29, 1
        %s184 = scalar_lea.sflag [#allocation3], %s183
        %s185 = sand.u32 %s29, 1
        %s186 = smul.addr %s185, 16
        %s187 = scalar_lea.vmem [#allocation2], %s186
        // Predicated region
        $region33: #{tpu_custom_call.1} parent=31 // pred_check
          %p188 = pneg %p42
        $region34: #{tpu_custom_call.1} parent=31 // pred_check_branch
          %190 = sbr.rel (%p188) target = $region36
        $region35: #{tpu_custom_call.1} parent=31 // pred_region
          %191 = dma.done %s184, 256
        $region36: #{tpu_custom_call.1} parent=31 // pred_fallthru
          _
        // Predicated region
        $region37: #{tpu_custom_call.1} parent=31 // pred_check
          %p192 = pneg %p63
        $region38: #{tpu_custom_call.1} parent=31 // pred_check_branch
          %194 = sbr.rel (%p192) target = $region40
        $region39: #{tpu_custom_call.1} parent=31 // pred_region
          %195 = dma.done [#allocation6], 256
        $region40: #{tpu_custom_call.1} parent=31 // pred_fallthru
          _
        // Predicated region
        $region41: #{tpu_custom_call.1} parent=31 // pred_check
          %p196 = pneg %p84
        $region42: #{tpu_custom_call.1} parent=31 // pred_check_branch
          %198 = sbr.rel (%p196) target = $region44
        $region43: #{tpu_custom_call.1} parent=31 // pred_region
          %199 = dma.done [#allocation6], 256
        $region44: #{tpu_custom_call.1} parent=31 // pred_fallthru
          _
        %s200 = sand.u32 %s29, 1
        %s201 = scalar_lea.sflag [#allocation3], %s200
        %s202 = sand.u32 %s29, 1
        %s203 = smul.addr %s202, 16
        %s204 = scalar_lea.vmem [#allocation2], %s203
        %p205 = pneg %p42
        %p206 = pneg %p39
        %p207 = pneg %p63
        %p208 = pneg %p60
        %p209 = pneg %p84
        %p210 = pneg %p81
        %p211 = pneg %p110
        %p212 = pneg %p107
        %s213 = sand.u32 %s97, 1
        %s214 = scalar_lea.sflag [#allocation4], %s213
        %s215 = sand.u32 %s97, 1
        %s216 = smul.addr %s215, 16
        %s217 = scalar_lea.vmem [#allocation8], %s216
        %v218 = vld [vmem:[%s187] sm:$0xff]
        %v219 = vld [vmem:[%s187 + $0x8] sm:$0xff]
        %v220 = vld [vmem:[#allocation5] sm:$0xff]
        %v221 = vld [vmem:[#allocation5 + $0x8] sm:$0xff]
        %vm222 = vcmask 130048
        %v224 = vsel %vm222, %v218, 0
        %v227 = vsel %vm222, %v219, 0
        %229 = vmatprep.subr.mxu0 0.0
        %v230 = vand.u32 %v220, 4294901760
        %231 = vmatpush1.msra.mxu0 %v230
        %232 = vmatprep.subr.mxu0 0.0
        %v233 = vand.u32 %v221, 4294901760
        %234 = vmatpush1.msra.mxu0 %v233
        %235 = vmatprep.subr.mxu0 0.0
        %236 = vmatpush1.msra.mxu0 0.0
        %237 = vmatprep.subr.mxu0 0.0
        %238 = vmatpush1.msra.mxu0 0.0
        %239 = vmatprep.subr.mxu0 0.0
        %240 = vmatpush1.msra.mxu0 0.0
        %241 = vmatprep.subr.mxu0 0.0
        %242 = vmatpush1.msra.mxu0 0.0
        %243 = vmatprep.subr.mxu0 0.0
        %244 = vmatpush1.msra.mxu0 0.0
        %245 = vmatprep.subr.mxu0 0.0
        %246 = vmatpush1.msra.mxu0 0.0
        %247 = vmatprep.subr.mxu0 0.0
        %248 = vmatpush1.msra.mxu0 0.0
        %249 = vmatprep.subr.mxu0 0.0
        %250 = vmatpush1.msra.mxu0 0.0
        %251 = vmatprep.subr.mxu0 0.0
        %252 = vmatpush1.msra.mxu0 0.0
        %253 = vmatprep.subr.mxu0 0.0
        %254 = vmatpush1.msra.mxu0 0.0
        %255 = vmatprep.subr.mxu0 0.0
        %256 = vmatpush1.msra.mxu0 0.0
        %257 = vmatprep.subr.mxu0 0.0
        %258 = vmatpush1.msra.mxu0 0.0
        %259 = vmatprep.subr.mxu0 0.0
        %260 = vmatpush1.msra.mxu0 0.0
        %261 = vmatprep.subr.mxu0 0.0
        %262 = vmatpush1.msra.mxu0 0.0
        %263 = vmatprep.subr.mxu0 0.0
        %264 = vmatpush1.msra.mxu0 0.0
        %265 = vmatprep.subr.mxu0 0.0
        %266 = vmatpush1.msra.mxu0 0.0
        %267 = vmatprep.subr.mxu0 0.0
        %268 = vmatpush1.msra.mxu0 0.0
        %269 = vmatprep.subr.mxu0 0.0
        %270 = vmatpush1.msra.mxu0 0.0
        %271 = vmatprep.subr.mxu0 0.0
        %272 = vmatpush1.msra.mxu0 0.0
        %273 = vmatprep.subr.mxu0 0.0
        %274 = vmatpush1.msra.mxu0 0.0
        %275 = vmatprep.subr.mxu0 0.0
        %276 = vmatpush1.msra.mxu0 0.0
        %277 = vmatprep.subr.mxu0 0.0
        %278 = vmatpush1.msra.mxu0 0.0
        %279 = vmatprep.subr.mxu0 0.0
        %280 = vmatpush1.msra.mxu0 0.0
        %281 = vmatprep.subr.mxu0 0.0
        %282 = vmatpush1.msra.mxu0 0.0
        %283 = vmatprep.subr.mxu0 0.0
        %284 = vmatpush1.msra.mxu0 0.0
        %285 = vmatprep.subr.mxu0 0.0
        %286 = vmatpush1.msra.mxu0 0.0
        %287 = vmatprep.subr.mxu0 0.0
        %288 = vmatpush1.msra.mxu0 0.0
        %289 = vmatprep.subr.mxu0 0.0
        %290 = vmatpush1.msra.mxu0 0.0
        %291 = vmatprep.subr.mxu0 0.0
        %292 = vmatpush1.msra.mxu0 0.0
        %293 = vmatprep.subr.mxu0 0.0
        %294 = vmatpush1.msra.mxu0 0.0
        %295 = vmatprep.mubr.f32.mxu0 0.0
        %v296 = vand.u32 %v224, 4294901760
        %v297 = vsub.f32 %v224, %v296
        %v298 = vand.u32 %v297, 4294901760
        %v299 = vsub.f32 %v297, %v298
        %v300 = vand.u32 %v299, 4294901760
        %301 = vmatmul.mubr.f32.gmra.mrb[0].mxu0 %v300
        %v302 = vpop.f32.mrb[0].mxu0
        %v303 = vadd.f32 0.0, %v302
        %v304 = vpop.f32.mrb[0].mxu0
        %305 = vmatprep.mubr.f32.mxu0 0.0
        %v306 = vand.u32 %v227, 4294901760
        %v307 = vsub.f32 %v227, %v306
        %v308 = vand.u32 %v307, 4294901760
        %v309 = vsub.f32 %v307, %v308
        %v310 = vand.u32 %v309, 4294901760
        %311 = vmatmul.mubr.f32.gmra.mrb[0].mxu0 %v310
        %v312 = vpop.f32.mrb[0].mxu0
        %v313 = vadd.f32 0.0, %v312
        %v314 = vpop.f32.mrb[0].mxu0
        %315 = vdwg.mxu0
        %316 = vmatprep.subr.mxu0 0.0
        %v317 = vand.u32 %v220, 4294901760
        %v318 = vsub.f32 %v220, %v317
        %v319 = vand.u32 %v318, 4294901760
        %v320 = vsub.f32 %v318, %v319
        %v321 = vand.u32 %v320, 4294901760
        %322 = vmatpush1.msra.mxu0 %v321
        %323 = vmatprep.subr.mxu0 0.0
        %v324 = vand.u32 %v221, 4294901760
        %v325 = vsub.f32 %v221, %v324
        %v326 = vand.u32 %v325, 4294901760
        %v327 = vsub.f32 %v325, %v326
        %v328 = vand.u32 %v327, 4294901760
        %329 = vmatpush1.msra.mxu0 %v328
        %330 = vmatprep.subr.mxu0 0.0
        %331 = vmatpush1.msra.mxu0 0.0
        %332 = vmatprep.subr.mxu0 0.0
        %333 = vmatpush1.msra.mxu0 0.0
        %334 = vmatprep.subr.mxu0 0.0
        %335 = vmatpush1.msra.mxu0 0.0
        %336 = vmatprep.subr.mxu0 0.0
        %337 = vmatpush1.msra.mxu0 0.0
        %338 = vmatprep.subr.mxu0 0.0
        %339 = vmatpush1.msra.mxu0 0.0
        %340 = vmatprep.subr.mxu0 0.0
        %341 = vmatpush1.msra.mxu0 0.0
        %342 = vmatprep.subr.mxu0 0.0
        %343 = vmatpush1.msra.mxu0 0.0
        %344 = vmatprep.subr.mxu0 0.0
        %345 = vmatpush1.msra.mxu0 0.0
        %346 = vmatprep.subr.mxu0 0.0
        %347 = vmatpush1.msra.mxu0 0.0
        %348 = vmatprep.subr.mxu0 0.0
        %349 = vmatpush1.msra.mxu0 0.0
        %350 = vmatprep.subr.mxu0 0.0
        %351 = vmatpush1.msra.mxu0 0.0
        %352 = vmatprep.subr.mxu0 0.0
        %353 = vmatpush1.msra.mxu0 0.0
        %354 = vmatprep.subr.mxu0 0.0
        %355 = vmatpush1.msra.mxu0 0.0
        %356 = vmatprep.subr.mxu0 0.0
        %357 = vmatpush1.msra.mxu0 0.0
        %358 = vmatprep.subr.mxu0 0.0
        %359 = vmatpush1.msra.mxu0 0.0
        %360 = vmatprep.subr.mxu0 0.0
        %361 = vmatpush1.msra.mxu0 0.0
        %362 = vmatprep.subr.mxu0 0.0
        %363 = vmatpush1.msra.mxu0 0.0
        %364 = vmatprep.subr.mxu0 0.0
        %365 = vmatpush1.msra.mxu0 0.0
        %366 = vmatprep.subr.mxu0 0.0
        %367 = vmatpush1.msra.mxu0 0.0
        %368 = vmatprep.subr.mxu0 0.0
        %369 = vmatpush1.msra.mxu0 0.0
        %370 = vmatprep.subr.mxu0 0.0
        %371 = vmatpush1.msra.mxu0 0.0
        %372 = vmatprep.subr.mxu0 0.0
        %373 = vmatpush1.msra.mxu0 0.0
        %374 = vmatprep.subr.mxu0 0.0
        %375 = vmatpush1.msra.mxu0 0.0
        %376 = vmatprep.subr.mxu0 0.0
        %377 = vmatpush1.msra.mxu0 0.0
        %378 = vmatprep.subr.mxu0 0.0
        %379 = vmatpush1.msra.mxu0 0.0
        %380 = vmatprep.subr.mxu0 0.0
        %381 = vmatpush1.msra.mxu0 0.0
        %382 = vmatprep.subr.mxu0 0.0
        %383 = vmatpush1.msra.mxu0 0.0
        %384 = vmatprep.subr.mxu0 0.0
        %385 = vmatpush1.msra.mxu0 0.0
        %386 = vmatprep.subr.mxu0 0.0
        %387 = vmatpush1.msra.mxu0 0.0
        %388 = vmatprep.subr.mxu0 0.0
        %389 = vmatpush1.msra.mxu0 0.0
        %390 = vmatprep.mubr.f32.mxu0 0.0
        %v391 = vand.u32 %v224, 4294901760
        %392 = vmatmul.mubr.f32.gmra.mrb[0].mxu0 %v391
        %v393 = vpop.f32.mrb[0].mxu0
        %v394 = vadd.f32 %v303, %v393
        %v395 = vpop.f32.mrb[0].mxu0
        %396 = vmatprep.mubr.f32.mxu0 0.0
        %v397 = vand.u32 %v227, 4294901760
        %398 = vmatmul.mubr.f32.gmra.mrb[0].mxu0 %v397
        %v399 = vpop.f32.mrb[0].mxu0
        %v400 = vadd.f32 %v313, %v399
        %v401 = vpop.f32.mrb[0].mxu0
        %402 = vdwg.mxu0
        %403 = vmatprep.subr.mxu0 0.0
        %v404 = vand.u32 %v220, 4294901760
        %v405 = vsub.f32 %v220, %v404
        %406 = vmatpush1.msra.mxu0 %v405
        %407 = vmatprep.subr.mxu0 0.0
        %v408 = vand.u32 %v221, 4294901760
        %v409 = vsub.f32 %v221, %v408
        %410 = vmatpush1.msra.mxu0 %v409
        %411 = vmatprep.subr.mxu0 0.0
        %412 = vmatpush1.msra.mxu0 0.0
        %413 = vmatprep.subr.mxu0 0.0
        %414 = vmatpush1.msra.mxu0 0.0
        %415 = vmatprep.subr.mxu0 0.0
        %416 = vmatpush1.msra.mxu0 0.0
        %417 = vmatprep.subr.mxu0 0.0
        %418 = vmatpush1.msra.mxu0 0.0
        %419 = vmatprep.subr.mxu0 0.0
        %420 = vmatpush1.msra.mxu0 0.0
        %421 = vmatprep.subr.mxu0 0.0
        %422 = vmatpush1.msra.mxu0 0.0
        %423 = vmatprep.subr.mxu0 0.0
        %424 = vmatpush1.msra.mxu0 0.0
        %425 = vmatprep.subr.mxu0 0.0
        %426 = vmatpush1.msra.mxu0 0.0
        %427 = vmatprep.subr.mxu0 0.0
        %428 = vmatpush1.msra.mxu0 0.0
        %429 = vmatprep.subr.mxu0 0.0
        %430 = vmatpush1.msra.mxu0 0.0
        %431 = vmatprep.subr.mxu0 0.0
        %432 = vmatpush1.msra.mxu0 0.0
        %433 = vmatprep.subr.mxu0 0.0
        %434 = vmatpush1.msra.mxu0 0.0
        %435 = vmatprep.subr.mxu0 0.0
        %436 = vmatpush1.msra.mxu0 0.0
        %437 = vmatprep.subr.mxu0 0.0
        %438 = vmatpush1.msra.mxu0 0.0
        %439 = vmatprep.subr.mxu0 0.0
        %440 = vmatpush1.msra.mxu0 0.0
        %441 = vmatprep.subr.mxu0 0.0
        %442 = vmatpush1.msra.mxu0 0.0
        %443 = vmatprep.subr.mxu0 0.0
        %444 = vmatpush1.msra.mxu0 0.0
        %445 = vmatprep.subr.mxu0 0.0
        %446 = vmatpush1.msra.mxu0 0.0
        %447 = vmatprep.subr.mxu0 0.0
        %448 = vmatpush1.msra.mxu0 0.0
        %449 = vmatprep.subr.mxu0 0.0
        %450 = vmatpush1.msra.mxu0 0.0
        %451 = vmatprep.subr.mxu0 0.0
        %452 = vmatpush1.msra.mxu0 0.0
        %453 = vmatprep.subr.mxu0 0.0
        %454 = vmatpush1.msra.mxu0 0.0
        %455 = vmatprep.subr.mxu0 0.0
        %456 = vmatpush1.msra.mxu0 0.0
        %457 = vmatprep.subr.mxu0 0.0
        %458 = vmatpush1.msra.mxu0 0.0
        %459 = vmatprep.subr.mxu0 0.0
        %460 = vmatpush1.msra.mxu0 0.0
        %461 = vmatprep.subr.mxu0 0.0
        %462 = vmatpush1.msra.mxu0 0.0
        %463 = vmatprep.subr.mxu0 0.0
        %464 = vmatpush1.msra.mxu0 0.0
        %465 = vmatprep.subr.mxu0 0.0
        %466 = vmatpush1.msra.mxu0 0.0
        %467 = vmatprep.subr.mxu0 0.0
        %468 = vmatpush1.msra.mxu0 0.0
        %469 = vmatprep.subr.mxu0 0.0
        %470 = vmatpush1.msra.mxu0 0.0
        %471 = vmatprep.mubr.f32.mxu0 0.0
        %v472 = vand.u32 %v224, 4294901760
        %v473 = vsub.f32 %v224, %v472
        %474 = vmatmul.mubr.f32.gmra.mrb[0].mxu0 %v473
        %v475 = vpop.f32.mrb[0].mxu0
        %v476 = vadd.f32 %v394, %v475
        %v477 = vpop.f32.mrb[0].mxu0
        %478 = vmatprep.mubr.f32.mxu0 0.0
        %v479 = vand.u32 %v227, 4294901760
        %v480 = vsub.f32 %v227, %v479
        %481 = vmatmul.mubr.f32.gmra.mrb[0].mxu0 %v480
        %v482 = vpop.f32.mrb[0].mxu0
        %v483 = vadd.f32 %v400, %v482
        %v484 = vpop.f32.mrb[0].mxu0
        %485 = vdwg.mxu0
        %486 = vmatprep.subr.mxu0 0.0
        %v487 = vand.u32 %v220, 4294901760
        %488 = vmatpush1.msra.mxu0 %v487
        %489 = vmatprep.subr.mxu0 0.0
        %v490 = vand.u32 %v221, 4294901760
        %491 = vmatpush1.msra.mxu0 %v490
        %492 = vmatprep.subr.mxu0 0.0
        %493 = vmatpush1.msra.mxu0 0.0
        %494 = vmatprep.subr.mxu0 0.0
        %495 = vmatpush1.msra.mxu0 0.0
        %496 = vmatprep.subr.mxu0 0.0
        %497 = vmatpush1.msra.mxu0 0.0
        %498 = vmatprep.subr.mxu0 0.0
        %499 = vmatpush1.msra.mxu0 0.0
        %500 = vmatprep.subr.mxu0 0.0
        %501 = vmatpush1.msra.mxu0 0.0
        %502 = vmatprep.subr.mxu0 0.0
        %503 = vmatpush1.msra.mxu0 0.0
        %504 = vmatprep.subr.mxu0 0.0
        %505 = vmatpush1.msra.mxu0 0.0
        %506 = vmatprep.subr.mxu0 0.0
        %507 = vmatpush1.msra.mxu0 0.0
        %508 = vmatprep.subr.mxu0 0.0
        %509 = vmatpush1.msra.mxu0 0.0
        %510 = vmatprep.subr.mxu0 0.0
        %511 = vmatpush1.msra.mxu0 0.0
        %512 = vmatprep.subr.mxu0 0.0
        %513 = vmatpush1.msra.mxu0 0.0
        %514 = vmatprep.subr.mxu0 0.0
        %515 = vmatpush1.msra.mxu0 0.0
        %516 = vmatprep.subr.mxu0 0.0
        %517 = vmatpush1.msra.mxu0 0.0
        %518 = vmatprep.subr.mxu0 0.0
        %519 = vmatpush1.msra.mxu0 0.0
        %520 = vmatprep.subr.mxu0 0.0
        %521 = vmatpush1.msra.mxu0 0.0
        %522 = vmatprep.subr.mxu0 0.0
        %523 = vmatpush1.msra.mxu0 0.0
        %524 = vmatprep.subr.mxu0 0.0
        %525 = vmatpush1.msra.mxu0 0.0
        %526 = vmatprep.subr.mxu0 0.0
        %527 = vmatpush1.msra.mxu0 0.0
        %528 = vmatprep.subr.mxu0 0.0
        %529 = vmatpush1.msra.mxu0 0.0
        %530 = vmatprep.subr.mxu0 0.0
        %531 = vmatpush1.msra.mxu0 0.0
        %532 = vmatprep.subr.mxu0 0.0
        %533 = vmatpush1.msra.mxu0 0.0
        %534 = vmatprep.subr.mxu0 0.0
        %535 = vmatpush1.msra.mxu0 0.0
        %536 = vmatprep.subr.mxu0 0.0
        %537 = vmatpush1.msra.mxu0 0.0
        %538 = vmatprep.subr.mxu0 0.0
        %539 = vmatpush1.msra.mxu0 0.0
        %540 = vmatprep.subr.mxu0 0.0
        %541 = vmatpush1.msra.mxu0 0.0
        %542 = vmatprep.subr.mxu0 0.0
        %543 = vmatpush1.msra.mxu0 0.0
        %544 = vmatprep.subr.mxu0 0.0
        %545 = vmatpush1.msra.mxu0 0.0
        %546 = vmatprep.subr.mxu0 0.0
        %547 = vmatpush1.msra.mxu0 0.0
        %548 = vmatprep.subr.mxu0 0.0
        %549 = vmatpush1.msra.mxu0 0.0
        %550 = vmatprep.subr.mxu0 0.0
        %551 = vmatpush1.msra.mxu0 0.0
        %552 = vmatprep.mubr.f32.mxu0 0.0
        %v553 = vand.u32 %v224, 4294901760
        %v554 = vsub.f32 %v224, %v553
        %v555 = vand.u32 %v554, 4294901760
        %556 = vmatmul.mubr.f32.gmra.mrb[0].mxu0 %v555
        %v557 = vpop.f32.mrb[0].mxu0
        %v558 = vadd.f32 %v476, %v557
        %v559 = vpop.f32.mrb[0].mxu0
        %560 = vmatprep.mubr.f32.mxu0 0.0
        %v561 = vand.u32 %v227, 4294901760
        %v562 = vsub.f32 %v227, %v561
        %v563 = vand.u32 %v562, 4294901760
        %564 = vmatmul.mubr.f32.gmra.mrb[0].mxu0 %v563
        %v565 = vpop.f32.mrb[0].mxu0
        %v566 = vadd.f32 %v483, %v565
        %v567 = vpop.f32.mrb[0].mxu0
        %568 = vdwg.mxu0
        %569 = vmatprep.subr.mxu0 0.0
        %v570 = vand.u32 %v220, 4294901760
        %v571 = vsub.f32 %v220, %v570
        %v572 = vand.u32 %v571, 4294901760
        %573 = vmatpush1.msra.mxu0 %v572
        %574 = vmatprep.subr.mxu0 0.0
        %v575 = vand.u32 %v221, 4294901760
        %v576 = vsub.f32 %v221, %v575
        %v577 = vand.u32 %v576, 4294901760
        %578 = vmatpush1.msra.mxu0 %v577
        %579 = vmatprep.subr.mxu0 0.0
        %580 = vmatpush1.msra.mxu0 0.0
        %581 = vmatprep.subr.mxu0 0.0
        %582 = vmatpush1.msra.mxu0 0.0
        %583 = vmatprep.subr.mxu0 0.0
        %584 = vmatpush1.msra.mxu0 0.0
        %585 = vmatprep.subr.mxu0 0.0
        %586 = vmatpush1.msra.mxu0 0.0
        %587 = vmatprep.subr.mxu0 0.0
        %588 = vmatpush1.msra.mxu0 0.0
        %589 = vmatprep.subr.mxu0 0.0
        %590 = vmatpush1.msra.mxu0 0.0
        %591 = vmatprep.subr.mxu0 0.0
        %592 = vmatpush1.msra.mxu0 0.0
        %593 = vmatprep.subr.mxu0 0.0
        %594 = vmatpush1.msra.mxu0 0.0
        %595 = vmatprep.subr.mxu0 0.0
        %596 = vmatpush1.msra.mxu0 0.0
        %597 = vmatprep.subr.mxu0 0.0
        %598 = vmatpush1.msra.mxu0 0.0
        %599 = vmatprep.subr.mxu0 0.0
        %600 = vmatpush1.msra.mxu0 0.0
        %601 = vmatprep.subr.mxu0 0.0
        %602 = vmatpush1.msra.mxu0 0.0
        %603 = vmatprep.subr.mxu0 0.0
        %604 = vmatpush1.msra.mxu0 0.0
        %605 = vmatprep.subr.mxu0 0.0
        %606 = vmatpush1.msra.mxu0 0.0
        %607 = vmatprep.subr.mxu0 0.0
        %608 = vmatpush1.msra.mxu0 0.0
        %609 = vmatprep.subr.mxu0 0.0
        %610 = vmatpush1.msra.mxu0 0.0
        %611 = vmatprep.subr.mxu0 0.0
        %612 = vmatpush1.msra.mxu0 0.0
        %613 = vmatprep.subr.mxu0 0.0
        %614 = vmatpush1.msra.mxu0 0.0
        %615 = vmatprep.subr.mxu0 0.0
        %616 = vmatpush1.msra.mxu0 0.0
        %617 = vmatprep.subr.mxu0 0.0
        %618 = vmatpush1.msra.mxu0 0.0
        %619 = vmatprep.subr.mxu0 0.0
        %620 = vmatpush1.msra.mxu0 0.0
        %621 = vmatprep.subr.mxu0 0.0
        %622 = vmatpush1.msra.mxu0 0.0
        %623 = vmatprep.subr.mxu0 0.0
        %624 = vmatpush1.msra.mxu0 0.0
        %625 = vmatprep.subr.mxu0 0.0
        %626 = vmatpush1.msra.mxu0 0.0
        %627 = vmatprep.subr.mxu0 0.0
        %628 = vmatpush1.msra.mxu0 0.0
        %629 = vmatprep.subr.mxu0 0.0
        %630 = vmatpush1.msra.mxu0 0.0
        %631 = vmatprep.subr.mxu0 0.0
        %632 = vmatpush1.msra.mxu0 0.0
        %633 = vmatprep.subr.mxu0 0.0
        %634 = vmatpush1.msra.mxu0 0.0
        %635 = vmatprep.subr.mxu0 0.0
        %636 = vmatpush1.msra.mxu0 0.0
        %637 = vmatprep.subr.mxu0 0.0
        %638 = vmatpush1.msra.mxu0 0.0
        %639 = vmatprep.mubr.f32.mxu0 0.0
        %v640 = vand.u32 %v224, 4294901760
        %641 = vmatmul.mubr.f32.gmra.mrb[0].mxu0 %v640
        %v642 = vpop.f32.mrb[0].mxu0
        %v643 = vadd.f32 %v558, %v642
        %v644 = vpop.f32.mrb[0].mxu0
        %645 = vmatprep.mubr.f32.mxu0 0.0
        %v646 = vand.u32 %v227, 4294901760
        %647 = vmatmul.mubr.f32.gmra.mrb[0].mxu0 %v646
        %v648 = vpop.f32.mrb[0].mxu0
        %v649 = vadd.f32 %v566, %v648
        %v650 = vpop.f32.mrb[0].mxu0
        %651 = vdwg.mxu0
        %652 = vmatprep.subr.mxu0 0.0
        %v653 = vand.u32 %v220, 4294901760
        %654 = vmatpush1.msra.mxu0 %v653
        %655 = vmatprep.subr.mxu0 0.0
        %v656 = vand.u32 %v221, 4294901760
        %657 = vmatpush1.msra.mxu0 %v656
        %658 = vmatprep.subr.mxu0 0.0
        %659 = vmatpush1.msra.mxu0 0.0
        %660 = vmatprep.subr.mxu0 0.0
        %661 = vmatpush1.msra.mxu0 0.0
        %662 = vmatprep.subr.mxu0 0.0
        %663 = vmatpush1.msra.mxu0 0.0
        %664 = vmatprep.subr.mxu0 0.0
        %665 = vmatpush1.msra.mxu0 0.0
        %666 = vmatprep.subr.mxu0 0.0
        %667 = vmatpush1.msra.mxu0 0.0
        %668 = vmatprep.subr.mxu0 0.0
        %669 = vmatpush1.msra.mxu0 0.0
        %670 = vmatprep.subr.mxu0 0.0
        %671 = vmatpush1.msra.mxu0 0.0
        %672 = vmatprep.subr.mxu0 0.0
        %673 = vmatpush1.msra.mxu0 0.0
        %674 = vmatprep.subr.mxu0 0.0
        %675 = vmatpush1.msra.mxu0 0.0
        %676 = vmatprep.subr.mxu0 0.0
        %677 = vmatpush1.msra.mxu0 0.0
        %678 = vmatprep.subr.mxu0 0.0
        %679 = vmatpush1.msra.mxu0 0.0
        %680 = vmatprep.subr.mxu0 0.0
        %681 = vmatpush1.msra.mxu0 0.0
        %682 = vmatprep.subr.mxu0 0.0
        %683 = vmatpush1.msra.mxu0 0.0
        %684 = vmatprep.subr.mxu0 0.0
        %685 = vmatpush1.msra.mxu0 0.0
        %686 = vmatprep.subr.mxu0 0.0
        %687 = vmatpush1.msra.mxu0 0.0
        %688 = vmatprep.subr.mxu0 0.0
        %689 = vmatpush1.msra.mxu0 0.0
        %690 = vmatprep.subr.mxu0 0.0
        %691 = vmatpush1.msra.mxu0 0.0
        %692 = vmatprep.subr.mxu0 0.0
        %693 = vmatpush1.msra.mxu0 0.0
        %694 = vmatprep.subr.mxu0 0.0
        %695 = vmatpush1.msra.mxu0 0.0
        %696 = vmatprep.subr.mxu0 0.0
        %697 = vmatpush1.msra.mxu0 0.0
        %698 = vmatprep.subr.mxu0 0.0
        %699 = vmatpush1.msra.mxu0 0.0
        %700 = vmatprep.subr.mxu0 0.0
        %701 = vmatpush1.msra.mxu0 0.0
        %702 = vmatprep.subr.mxu0 0.0
        %703 = vmatpush1.msra.mxu0 0.0
        %704 = vmatprep.subr.mxu0 0.0
        %705 = vmatpush1.msra.mxu0 0.0
        %706 = vmatprep.subr.mxu0 0.0
        %707 = vmatpush1.msra.mxu0 0.0
        %708 = vmatprep.subr.mxu0 0.0
        %709 = vmatpush1.msra.mxu0 0.0
        %710 = vmatprep.subr.mxu0 0.0
        %711 = vmatpush1.msra.mxu0 0.0
        %712 = vmatprep.subr.mxu0 0.0
        %713 = vmatpush1.msra.mxu0 0.0
        %714 = vmatprep.subr.mxu0 0.0
        %715 = vmatpush1.msra.mxu0 0.0
        %716 = vmatprep.subr.mxu0 0.0
        %717 = vmatpush1.msra.mxu0 0.0
        %718 = vmatprep.mubr.f32.mxu0 0.0
        %v719 = vand.u32 %v224, 4294901760
        %720 = vmatmul.mubr.f32.gmra.mrb[0].mxu0 %v719
        %v721 = vpop.f32.mrb[0].mxu0
        %v722 = vadd.f32 %v643, %v721
        %v723 = vpop.f32.mrb[0].mxu0
        %724 = vmatprep.mubr.f32.mxu0 0.0
        %v725 = vand.u32 %v227, 4294901760
        %726 = vmatmul.mubr.f32.gmra.mrb[0].mxu0 %v725
        %v727 = vpop.f32.mrb[0].mxu0
        %v728 = vadd.f32 %v649, %v727
        %v729 = vpop.f32.mrb[0].mxu0
        %730 = vdwg.mxu0
        %vm733 = vcmask 1040384
        %v734 = vrot.slane %v722, 7
        %v735 = vrot.slane %v728, 7
        %v736 = vsel %vm733, %v734, %v735
        %v740 = vrot.slane %v728, 6
        %v742 = vsel %vm733, %v722, %v734
        %v743 = vsel %vm733, %v735, %v740
        %v744 = vmul.f32 %v742, 2.0
        %v745 = vmul.f32 %v736, 2.0
        %v746 = vmul.f32 %v743, 2.0
        %vm750 = vcmask 1046528
        %v751 = vrot.slane %v744, 1
        %v752 = vrot.slane %v745, 1
        %v753 = vsel %vm750, %v751, %v752
        %v754 = vrot.slane %v746, 1
        %v755 = vsel %vm750, %v752, %v754
        %v758 = vadd.f32 %v742, %v753
        %v759 = vadd.f32 %v736, %v755
        %vm762 = vcmask 1045504
        %v763 = vrot.slane %v742, 2
        %v764 = vrot.slane %v736, 2
        %v765 = vsel %vm762, %v763, %v764
        %v766 = vrot.slane %v743, 2
        %v767 = vsel %vm762, %v764, %v766
        %v770 = vadd.f32 %v758, %v765
        %v771 = vadd.f32 %v759, %v767
        %v772 = vmul.f32 %v770, 0.125
        %v773 = vmul.f32 %v771, 0.125
        %vm774 = vcmask 1041408
        %v775 = vrot.slane %v742, 6
        %v776 = vrot.slane %v736, 6
        %v777 = vsel %vm774, %v775, %v776
        %v781 = vsub.f32 %v742, %v775
        %v782 = vsub.f32 %v736, %v777
        %v783 = vsub.f32 %v743, %v776
        %v784 = vmul.f32 %v781, 0.125
        %v785 = vmul.f32 %v782, 0.125
        %v786 = vmul.f32 %v783, 0.125
        %v787 = vmul.f32 %v772, %v772
        %v788 = vmul.f32 %v773, %v773
        %v789 = vmul.f32 %v784, %v784
        %v790 = vmul.f32 %v785, %v785
        %v791 = vmul.f32 %v786, %v786
        %v795 = vrot.slane %v784, 2
        %v796 = vrot.slane %v785, 2
        %v797 = vsel %vm762, %v795, %v796
        %v798 = vrot.slane %v786, 2
        %v799 = vsel %vm762, %v796, %v798
        %800 = vrot.lane.b32.xlu0 %v797, 112
        %v801 = vpop.permute.xlu0 %800
        %802 = vrot.lane.b32.xlu0 %v799, 112
        %v803 = vpop.permute.xlu0 %802
        %v806 = vmul.f32 %v772, %v801
        %v807 = vmul.f32 %v773, %v803
        %v811 = vrot.slane %v789, 2
        %v812 = vrot.slane %v790, 2
        %v813 = vsel %vm762, %v811, %v812
        %v814 = vrot.slane %v791, 2
        %v815 = vsel %vm762, %v812, %v814
        %816 = vrot.lane.b32.xlu0 %v813, 112
        %v817 = vpop.permute.xlu0 %816
        %818 = vrot.lane.b32.xlu0 %v815, 112
        %v819 = vpop.permute.xlu0 %818
        %v820 = vld [vmem:[#allocation7] sm:$0xff]
        %v821 = vld [vmem:[#allocation7 + $0x8] sm:$0xff]
        %v823 = vsel %vm222, %v787, 0
        %v826 = vsel %vm222, %v788, 0
        %v828 = vsel %vm222, %v817, 0
        %v830 = vsel %vm222, %v819, 0
        %v833 = vsel %vm222, %v806, 0
        %v836 = vsel %vm222, %v807, 0
        %838 = vmatprep.subr.mxu0 0.0
        %v839 = vand.u32 %v820, 4294901760
        %840 = vmatpush1.msra.mxu0 %v839
        %841 = vmatprep.subr.mxu0 0.0
        %v842 = vand.u32 %v821, 4294901760
        %843 = vmatpush1.msra.mxu0 %v842
        %844 = vmatprep.subr.mxu0 0.0
        %845 = vmatpush1.msra.mxu0 0.0
        %846 = vmatprep.subr.mxu0 0.0
        %847 = vmatpush1.msra.mxu0 0.0
        %848 = vmatprep.subr.mxu0 0.0
        %849 = vmatpush1.msra.mxu0 0.0
        %850 = vmatprep.subr.mxu0 0.0
        %851 = vmatpush1.msra.mxu0 0.0
        %852 = vmatprep.subr.mxu0 0.0
        %853 = vmatpush1.msra.mxu0 0.0
        %854 = vmatprep.subr.mxu0 0.0
        %855 = vmatpush1.msra.mxu0 0.0
        %856 = vmatprep.subr.mxu0 0.0
        %857 = vmatpush1.msra.mxu0 0.0
        %858 = vmatprep.subr.mxu0 0.0
        %859 = vmatpush1.msra.mxu0 0.0
        %860 = vmatprep.subr.mxu0 0.0
        %861 = vmatpush1.msra.mxu0 0.0
        %862 = vmatprep.subr.mxu0 0.0
        %863 = vmatpush1.msra.mxu0 0.0
        %864 = vmatprep.subr.mxu0 0.0
        %865 = vmatpush1.msra.mxu0 0.0
        %866 = vmatprep.subr.mxu0 0.0
        %867 = vmatpush1.msra.mxu0 0.0
        %868 = vmatprep.subr.mxu0 0.0
        %869 = vmatpush1.msra.mxu0 0.0
        %870 = vmatprep.subr.mxu0 0.0
        %871 = vmatpush1.msra.mxu0 0.0
        %872 = vmatprep.subr.mxu0 0.0
        %873 = vmatpush1.msra.mxu0 0.0
        %874 = vmatprep.subr.mxu0 0.0
        %875 = vmatpush1.msra.mxu0 0.0
        %876 = vmatprep.subr.mxu0 0.0
        %877 = vmatpush1.msra.mxu0 0.0
        %878 = vmatprep.subr.mxu0 0.0
        %879 = vmatpush1.msra.mxu0 0.0
        %880 = vmatprep.subr.mxu0 0.0
        %881 = vmatpush1.msra.mxu0 0.0
        %882 = vmatprep.subr.mxu0 0.0
        %883 = vmatpush1.msra.mxu0 0.0
        %884 = vmatprep.subr.mxu0 0.0
        %885 = vmatpush1.msra.mxu0 0.0
        %886 = vmatprep.subr.mxu0 0.0
        %887 = vmatpush1.msra.mxu0 0.0
        %888 = vmatprep.subr.mxu0 0.0
        %889 = vmatpush1.msra.mxu0 0.0
        %890 = vmatprep.subr.mxu0 0.0
        %891 = vmatpush1.msra.mxu0 0.0
        %892 = vmatprep.subr.mxu0 0.0
        %893 = vmatpush1.msra.mxu0 0.0
        %894 = vmatprep.subr.mxu0 0.0
        %895 = vmatpush1.msra.mxu0 0.0
        %896 = vmatprep.subr.mxu0 0.0
        %897 = vmatpush1.msra.mxu0 0.0
        %898 = vmatprep.subr.mxu0 0.0
        %899 = vmatpush1.msra.mxu0 0.0
        %900 = vmatprep.subr.mxu0 0.0
        %901 = vmatpush1.msra.mxu0 0.0
        %902 = vmatprep.subr.mxu0 0.0
        %903 = vmatpush1.msra.mxu0 0.0
        %904 = vmatprep.mubr.f32.mxu0 0.0
        %v905 = vand.u32 %v823, 4294901760
        %v906 = vsub.f32 %v823, %v905
        %v907 = vand.u32 %v906, 4294901760
        %v908 = vsub.f32 %v906, %v907
        %v909 = vand.u32 %v908, 4294901760
        %910 = vmatmul.mubr.f32.gmra.mrb[0].mxu0 %v909
        %v911 = vpop.f32.mrb[0].mxu0
        %v912 = vadd.f32 0.0, %v911
        %v913 = vpop.f32.mrb[0].mxu0
        %914 = vmatprep.mubr.f32.mxu0 0.0
        %v915 = vand.u32 %v826, 4294901760
        %v916 = vsub.f32 %v826, %v915
        %v917 = vand.u32 %v916, 4294901760
        %v918 = vsub.f32 %v916, %v917
        %v919 = vand.u32 %v918, 4294901760
        %920 = vmatmul.mubr.f32.gmra.mrb[0].mxu0 %v919
        %v921 = vpop.f32.mrb[0].mxu0
        %v922 = vadd.f32 0.0, %v921
        %v923 = vpop.f32.mrb[0].mxu0
        %924 = vmatprep.mubr.f32.mxu0 0.0
        %v925 = vand.u32 %v828, 4294901760
        %v926 = vsub.f32 %v828, %v925
        %v927 = vand.u32 %v926, 4294901760
        %v928 = vsub.f32 %v926, %v927
        %v929 = vand.u32 %v928, 4294901760
        %930 = vmatmul.mubr.f32.gmra.mrb[0].mxu0 %v929
        %v931 = vpop.f32.mrb[0].mxu0
        %v932 = vadd.f32 0.0, %v931
        %v933 = vpop.f32.mrb[0].mxu0
        %934 = vmatprep.mubr.f32.mxu0 0.0
        %v935 = vand.u32 %v830, 4294901760
        %v936 = vsub.f32 %v830, %v935
        %v937 = vand.u32 %v936, 4294901760
        %v938 = vsub.f32 %v936, %v937
        %v939 = vand.u32 %v938, 4294901760
        %940 = vmatmul.mubr.f32.gmra.mrb[0].mxu0 %v939
        %v941 = vpop.f32.mrb[0].mxu0
        %v942 = vadd.f32 0.0, %v941
        %v943 = vpop.f32.mrb[0].mxu0
        %944 = vmatprep.mubr.f32.mxu0 0.0
        %v945 = vand.u32 %v833, 4294901760
        %v946 = vsub.f32 %v833, %v945
        %v947 = vand.u32 %v946, 4294901760
        %v948 = vsub.f32 %v946, %v947
        %v949 = vand.u32 %v948, 4294901760
        %950 = vmatmul.mubr.f32.gmra.mrb[0].mxu0 %v949
        %v951 = vpop.f32.mrb[0].mxu0
        %v952 = vadd.f32 0.0, %v951
        %v953 = vpop.f32.mrb[0].mxu0
        %954 = vmatprep.mubr.f32.mxu0 0.0
        %v955 = vand.u32 %v836, 4294901760
        %v956 = vsub.f32 %v836, %v955
        %v957 = vand.u32 %v956, 4294901760
        %v958 = vsub.f32 %v956, %v957
        %v959 = vand.u32 %v958, 4294901760
        %960 = vmatmul.mubr.f32.gmra.mrb[0].mxu0 %v959
        %v961 = vpop.f32.mrb[0].mxu0
        %v962 = vadd.f32 0.0, %v961
        %v963 = vpop.f32.mrb[0].mxu0
        %964 = vdwg.mxu0
        %965 = vmatprep.subr.mxu0 0.0
        %v966 = vand.u32 %v820, 4294901760
        %v967 = vsub.f32 %v820, %v966
        %v968 = vand.u32 %v967, 4294901760
        %v969 = vsub.f32 %v967, %v968
        %v970 = vand.u32 %v969, 4294901760
        %971 = vmatpush1.msra.mxu0 %v970
        %972 = vmatprep.subr.mxu0 0.0
        %v973 = vand.u32 %v821, 4294901760
        %v974 = vsub.f32 %v821, %v973
        %v975 = vand.u32 %v974, 4294901760
        %v976 = vsub.f32 %v974, %v975
        %v977 = vand.u32 %v976, 4294901760
        %978 = vmatpush1.msra.mxu0 %v977
        %979 = vmatprep.subr.mxu0 0.0
        %980 = vmatpush1.msra.mxu0 0.0
        %981 = vmatprep.subr.mxu0 0.0
        %982 = vmatpush1.msra.mxu0 0.0
        %983 = vmatprep.subr.mxu0 0.0
        %984 = vmatpush1.msra.mxu0 0.0
        %985 = vmatprep.subr.mxu0 0.0
        %986 = vmatpush1.msra.mxu0 0.0
        %987 = vmatprep.subr.mxu0 0.0
        %988 = vmatpush1.msra.mxu0 0.0
        %989 = vmatprep.subr.mxu0 0.0
        %990 = vmatpush1.msra.mxu0 0.0
        %991 = vmatprep.subr.mxu0 0.0
        %992 = vmatpush1.msra.mxu0 0.0
        %993 = vmatprep.subr.mxu0 0.0
        %994 = vmatpush1.msra.mxu0 0.0
        %995 = vmatprep.subr.mxu0 0.0
        %996 = vmatpush1.msra.mxu0 0.0
        %997 = vmatprep.subr.mxu0 0.0
        %998 = vmatpush1.msra.mxu0 0.0
        %999 = vmatprep.subr.mxu0 0.0
        %1000 = vmatpush1.msra.mxu0 0.0
        %1001 = vmatprep.subr.mxu0 0.0
        %1002 = vmatpush1.msra.mxu0 0.0
        %1003 = vmatprep.subr.mxu0 0.0
        %1004 = vmatpush1.msra.mxu0 0.0
        %1005 = vmatprep.subr.mxu0 0.0
        %1006 = vmatpush1.msra.mxu0 0.0
        %1007 = vmatprep.subr.mxu0 0.0
        %1008 = vmatpush1.msra.mxu0 0.0
        %1009 = vmatprep.subr.mxu0 0.0
        %1010 = vmatpush1.msra.mxu0 0.0
        %1011 = vmatprep.subr.mxu0 0.0
        %1012 = vmatpush1.msra.mxu0 0.0
        %1013 = vmatprep.subr.mxu0 0.0
        %1014 = vmatpush1.msra.mxu0 0.0
        %1015 = vmatprep.subr.mxu0 0.0
        %1016 = vmatpush1.msra.mxu0 0.0
        %1017 = vmatprep.subr.mxu0 0.0
        %1018 = vmatpush1.msra.mxu0 0.0
        %1019 = vmatprep.subr.mxu0 0.0
        %1020 = vmatpush1.msra.mxu0 0.0
        %1021 = vmatprep.subr.mxu0 0.0
        %1022 = vmatpush1.msra.mxu0 0.0
        %1023 = vmatprep.subr.mxu0 0.0
        %1024 = vmatpush1.msra.mxu0 0.0
        %1025 = vmatprep.subr.mxu0 0.0
        %1026 = vmatpush1.msra.mxu0 0.0
        %1027 = vmatprep.subr.mxu0 0.0
        %1028 = vmatpush1.msra.mxu0 0.0
        %1029 = vmatprep.subr.mxu0 0.0
        %1030 = vmatpush1.msra.mxu0 0.0
        %1031 = vmatprep.subr.mxu0 0.0
        %1032 = vmatpush1.msra.mxu0 0.0
        %1033 = vmatprep.subr.mxu0 0.0
        %1034 = vmatpush1.msra.mxu0 0.0
        %1035 = vmatprep.subr.mxu0 0.0
        %1036 = vmatpush1.msra.mxu0 0.0
        %1037 = vmatprep.subr.mxu0 0.0
        %1038 = vmatpush1.msra.mxu0 0.0
        %1039 = vmatprep.mubr.f32.mxu0 0.0
        %v1040 = vand.u32 %v823, 4294901760
        %1041 = vmatmul.mubr.f32.gmra.mrb[0].mxu0 %v1040
        %v1042 = vpop.f32.mrb[0].mxu0
        %v1043 = vadd.f32 %v912, %v1042
        %v1044 = vpop.f32.mrb[0].mxu0
        %1045 = vmatprep.mubr.f32.mxu0 0.0
        %v1046 = vand.u32 %v826, 4294901760
        %1047 = vmatmul.mubr.f32.gmra.mrb[0].mxu0 %v1046
        %v1048 = vpop.f32.mrb[0].mxu0
        %v1049 = vadd.f32 %v922, %v1048
        %v1050 = vpop.f32.mrb[0].mxu0
        %1051 = vmatprep.mubr.f32.mxu0 0.0
        %v1052 = vand.u32 %v828, 4294901760
        %1053 = vmatmul.mubr.f32.gmra.mrb[0].mxu0 %v1052
        %v1054 = vpop.f32.mrb[0].mxu0
        %v1055 = vadd.f32 %v932, %v1054
        %v1056 = vpop.f32.mrb[0].mxu0
        %1057 = vmatprep.mubr.f32.mxu0 0.0
        %v1058 = vand.u32 %v830, 4294901760
        %1059 = vmatmul.mubr.f32.gmra.mrb[0].mxu0 %v1058
        %v1060 = vpop.f32.mrb[0].mxu0
        %v1061 = vadd.f32 %v942, %v1060
        %v1062 = vpop.f32.mrb[0].mxu0
        %1063 = vmatprep.mubr.f32.mxu0 0.0
        %v1064 = vand.u32 %v833, 4294901760
        %1065 = vmatmul.mubr.f32.gmra.mrb[0].mxu0 %v1064
        %v1066 = vpop.f32.mrb[0].mxu0
        %v1067 = vadd.f32 %v952, %v1066
        %v1068 = vpop.f32.mrb[0].mxu0
        %1069 = vmatprep.mubr.f32.mxu0 0.0
        %v1070 = vand.u32 %v836, 4294901760
        %1071 = vmatmul.mubr.f32.gmra.mrb[0].mxu0 %v1070
        %v1072 = vpop.f32.mrb[0].mxu0
        %v1073 = vadd.f32 %v962, %v1072
        %v1074 = vpop.f32.mrb[0].mxu0
        %1075 = vdwg.mxu0
        %1076 = vmatprep.subr.mxu0 0.0
        %v1077 = vand.u32 %v820, 4294901760
        %v1078 = vsub.f32 %v820, %v1077
        %1079 = vmatpush1.msra.mxu0 %v1078
        %1080 = vmatprep.subr.mxu0 0.0
        %v1081 = vand.u32 %v821, 4294901760
        %v1082 = vsub.f32 %v821, %v1081
        %1083 = vmatpush1.msra.mxu0 %v1082
        %1084 = vmatprep.subr.mxu0 0.0
        %1085 = vmatpush1.msra.mxu0 0.0
        %1086 = vmatprep.subr.mxu0 0.0
        %1087 = vmatpush1.msra.mxu0 0.0
        %1088 = vmatprep.subr.mxu0 0.0
        %1089 = vmatpush1.msra.mxu0 0.0
        %1090 = vmatprep.subr.mxu0 0.0
        %1091 = vmatpush1.msra.mxu0 0.0
        %1092 = vmatprep.subr.mxu0 0.0
        %1093 = vmatpush1.msra.mxu0 0.0
        %1094 = vmatprep.subr.mxu0 0.0
        %1095 = vmatpush1.msra.mxu0 0.0
        %1096 = vmatprep.subr.mxu0 0.0
        %1097 = vmatpush1.msra.mxu0 0.0
        %1098 = vmatprep.subr.mxu0 0.0
        %1099 = vmatpush1.msra.mxu0 0.0
        %1100 = vmatprep.subr.mxu0 0.0
        %1101 = vmatpush1.msra.mxu0 0.0
        %1102 = vmatprep.subr.mxu0 0.0
        %1103 = vmatpush1.msra.mxu0 0.0
        %1104 = vmatprep.subr.mxu0 0.0
        %1105 = vmatpush1.msra.mxu0 0.0
        %1106 = vmatprep.subr.mxu0 0.0
        %1107 = vmatpush1.msra.mxu0 0.0
        %1108 = vmatprep.subr.mxu0 0.0
        %1109 = vmatpush1.msra.mxu0 0.0
        %1110 = vmatprep.subr.mxu0 0.0
        %1111 = vmatpush1.msra.mxu0 0.0
        %1112 = vmatprep.subr.mxu0 0.0
        %1113 = vmatpush1.msra.mxu0 0.0
        %1114 = vmatprep.subr.mxu0 0.0
        %1115 = vmatpush1.msra.mxu0 0.0
        %1116 = vmatprep.subr.mxu0 0.0
        %1117 = vmatpush1.msra.mxu0 0.0
        %1118 = vmatprep.subr.mxu0 0.0
        %1119 = vmatpush1.msra.mxu0 0.0
        %1120 = vmatprep.subr.mxu0 0.0
        %1121 = vmatpush1.msra.mxu0 0.0
        %1122 = vmatprep.subr.mxu0 0.0
        %1123 = vmatpush1.msra.mxu0 0.0
        %1124 = vmatprep.subr.mxu0 0.0
        %1125 = vmatpush1.msra.mxu0 0.0
        %1126 = vmatprep.subr.mxu0 0.0
        %1127 = vmatpush1.msra.mxu0 0.0
        %1128 = vmatprep.subr.mxu0 0.0
        %1129 = vmatpush1.msra.mxu0 0.0
        %1130 = vmatprep.subr.mxu0 0.0
        %1131 = vmatpush1.msra.mxu0 0.0
        %1132 = vmatprep.subr.mxu0 0.0
        %1133 = vmatpush1.msra.mxu0 0.0
        %1134 = vmatprep.subr.mxu0 0.0
        %1135 = vmatpush1.msra.mxu0 0.0
        %1136 = vmatprep.subr.mxu0 0.0
        %1137 = vmatpush1.msra.mxu0 0.0
        %1138 = vmatprep.subr.mxu0 0.0
        %1139 = vmatpush1.msra.mxu0 0.0
        %1140 = vmatprep.subr.mxu0 0.0
        %1141 = vmatpush1.msra.mxu0 0.0
        %1142 = vmatprep.subr.mxu0 0.0
        %1143 = vmatpush1.msra.mxu0 0.0
        %1144 = vmatprep.mubr.f32.mxu0 0.0
        %v1145 = vand.u32 %v823, 4294901760
        %v1146 = vsub.f32 %v823, %v1145
        %1147 = vmatmul.mubr.f32.gmra.mrb[0].mxu0 %v1146
        %v1148 = vpop.f32.mrb[0].mxu0
        %v1149 = vadd.f32 %v1043, %v1148
        %v1150 = vpop.f32.mrb[0].mxu0
        %1151 = vmatprep.mubr.f32.mxu0 0.0
        %v1152 = vand.u32 %v826, 4294901760
        %v1153 = vsub.f32 %v826, %v1152
        %1154 = vmatmul.mubr.f32.gmra.mrb[0].mxu0 %v1153
        %v1155 = vpop.f32.mrb[0].mxu0
        %v1156 = vadd.f32 %v1049, %v1155
        %v1157 = vpop.f32.mrb[0].mxu0
        %1158 = vmatprep.mubr.f32.mxu0 0.0
        %v1159 = vand.u32 %v828, 4294901760
        %v1160 = vsub.f32 %v828, %v1159
        %1161 = vmatmul.mubr.f32.gmra.mrb[0].mxu0 %v1160
        %v1162 = vpop.f32.mrb[0].mxu0
        %v1163 = vadd.f32 %v1055, %v1162
        %v1164 = vpop.f32.mrb[0].mxu0
        %1165 = vmatprep.mubr.f32.mxu0 0.0
        %v1166 = vand.u32 %v830, 4294901760
        %v1167 = vsub.f32 %v830, %v1166
        %1168 = vmatmul.mubr.f32.gmra.mrb[0].mxu0 %v1167
        %v1169 = vpop.f32.mrb[0].mxu0
        %v1170 = vadd.f32 %v1061, %v1169
        %v1171 = vpop.f32.mrb[0].mxu0
        %1172 = vmatprep.mubr.f32.mxu0 0.0
        %v1173 = vand.u32 %v833, 4294901760
        %v1174 = vsub.f32 %v833, %v1173
        %1175 = vmatmul.mubr.f32.gmra.mrb[0].mxu0 %v1174
        %v1176 = vpop.f32.mrb[0].mxu0
        %v1177 = vadd.f32 %v1067, %v1176
        %v1178 = vpop.f32.mrb[0].mxu0
        %1179 = vmatprep.mubr.f32.mxu0 0.0
        %v1180 = vand.u32 %v836, 4294901760
        %v1181 = vsub.f32 %v836, %v1180
        %1182 = vmatmul.mubr.f32.gmra.mrb[0].mxu0 %v1181
        %v1183 = vpop.f32.mrb[0].mxu0
        %v1184 = vadd.f32 %v1073, %v1183
        %v1185 = vpop.f32.mrb[0].mxu0
        %1186 = vdwg.mxu0
        %1187 = vmatprep.subr.mxu0 0.0
        %v1188 = vand.u32 %v820, 4294901760
        %1189 = vmatpush1.msra.mxu0 %v1188
        %1190 = vmatprep.subr.mxu0 0.0
        %v1191 = vand.u32 %v821, 4294901760
        %1192 = vmatpush1.msra.mxu0 %v1191
        %1193 = vmatprep.subr.mxu0 0.0
        %1194 = vmatpush1.msra.mxu0 0.0
        %1195 = vmatprep.subr.mxu0 0.0
        %1196 = vmatpush1.msra.mxu0 0.0
        %1197 = vmatprep.subr.mxu0 0.0
        %1198 = vmatpush1.msra.mxu0 0.0
        %1199 = vmatprep.subr.mxu0 0.0
        %1200 = vmatpush1.msra.mxu0 0.0
        %1201 = vmatprep.subr.mxu0 0.0
        %1202 = vmatpush1.msra.mxu0 0.0
        %1203 = vmatprep.subr.mxu0 0.0
        %1204 = vmatpush1.msra.mxu0 0.0
        %1205 = vmatprep.subr.mxu0 0.0
        %1206 = vmatpush1.msra.mxu0 0.0
        %1207 = vmatprep.subr.mxu0 0.0
        %1208 = vmatpush1.msra.mxu0 0.0
        %1209 = vmatprep.subr.mxu0 0.0
        %1210 = vmatpush1.msra.mxu0 0.0
        %1211 = vmatprep.subr.mxu0 0.0
        %1212 = vmatpush1.msra.mxu0 0.0
        %1213 = vmatprep.subr.mxu0 0.0
        %1214 = vmatpush1.msra.mxu0 0.0
        %1215 = vmatprep.subr.mxu0 0.0
        %1216 = vmatpush1.msra.mxu0 0.0
        %1217 = vmatprep.subr.mxu0 0.0
        %1218 = vmatpush1.msra.mxu0 0.0
        %1219 = vmatprep.subr.mxu0 0.0
        %1220 = vmatpush1.msra.mxu0 0.0
        %1221 = vmatprep.subr.mxu0 0.0
        %1222 = vmatpush1.msra.mxu0 0.0
        %1223 = vmatprep.subr.mxu0 0.0
        %1224 = vmatpush1.msra.mxu0 0.0
        %1225 = vmatprep.subr.mxu0 0.0
        %1226 = vmatpush1.msra.mxu0 0.0
        %1227 = vmatprep.subr.mxu0 0.0
        %1228 = vmatpush1.msra.mxu0 0.0
        %1229 = vmatprep.subr.mxu0 0.0
        %1230 = vmatpush1.msra.mxu0 0.0
        %1231 = vmatprep.subr.mxu0 0.0
        %1232 = vmatpush1.msra.mxu0 0.0
        %1233 = vmatprep.subr.mxu0 0.0
        %1234 = vmatpush1.msra.mxu0 0.0
        %1235 = vmatprep.subr.mxu0 0.0
        %1236 = vmatpush1.msra.mxu0 0.0
        %1237 = vmatprep.subr.mxu0 0.0
        %1238 = vmatpush1.msra.mxu0 0.0
        %1239 = vmatprep.subr.mxu0 0.0
        %1240 = vmatpush1.msra.mxu0 0.0
        %1241 = vmatprep.subr.mxu0 0.0
        %1242 = vmatpush1.msra.mxu0 0.0
        %1243 = vmatprep.subr.mxu0 0.0
        %1244 = vmatpush1.msra.mxu0 0.0
        %1245 = vmatprep.subr.mxu0 0.0
        %1246 = vmatpush1.msra.mxu0 0.0
        %1247 = vmatprep.subr.mxu0 0.0
        %1248 = vmatpush1.msra.mxu0 0.0
        %1249 = vmatprep.subr.mxu0 0.0
        %1250 = vmatpush1.msra.mxu0 0.0
        %1251 = vmatprep.subr.mxu0 0.0
        %1252 = vmatpush1.msra.mxu0 0.0
        %1253 = vmatprep.mubr.f32.mxu0 0.0
        %v1254 = vand.u32 %v823, 4294901760
        %v1255 = vsub.f32 %v823, %v1254
        %v1256 = vand.u32 %v1255, 4294901760
        %1257 = vmatmul.mubr.f32.gmra.mrb[0].mxu0 %v1256
        %v1258 = vpop.f32.mrb[0].mxu0
        %v1259 = vadd.f32 %v1149, %v1258
        %v1260 = vpop.f32.mrb[0].mxu0
        %1261 = vmatprep.mubr.f32.mxu0 0.0
        %v1262 = vand.u32 %v826, 4294901760
        %v1263 = vsub.f32 %v826, %v1262
        %v1264 = vand.u32 %v1263, 4294901760
        %1265 = vmatmul.mubr.f32.gmra.mrb[0].mxu0 %v1264
        %v1266 = vpop.f32.mrb[0].mxu0
        %v1267 = vadd.f32 %v1156, %v1266
        %v1268 = vpop.f32.mrb[0].mxu0
        %1269 = vmatprep.mubr.f32.mxu0 0.0
        %v1270 = vand.u32 %v828, 4294901760
        %v1271 = vsub.f32 %v828, %v1270
        %v1272 = vand.u32 %v1271, 4294901760
        %1273 = vmatmul.mubr.f32.gmra.mrb[0].mxu0 %v1272
        %v1274 = vpop.f32.mrb[0].mxu0
        %v1275 = vadd.f32 %v1163, %v1274
        %v1276 = vpop.f32.mrb[0].mxu0
        %1277 = vmatprep.mubr.f32.mxu0 0.0
        %v1278 = vand.u32 %v830, 4294901760
        %v1279 = vsub.f32 %v830, %v1278
        %v1280 = vand.u32 %v1279, 4294901760
        %1281 = vmatmul.mubr.f32.gmra.mrb[0].mxu0 %v1280
        %v1282 = vpop.f32.mrb[0].mxu0
        %v1283 = vadd.f32 %v1170, %v1282
        %v1284 = vpop.f32.mrb[0].mxu0
        %1285 = vmatprep.mubr.f32.mxu0 0.0
        %v1286 = vand.u32 %v833, 4294901760
        %v1287 = vsub.f32 %v833, %v1286
        %v1288 = vand.u32 %v1287, 4294901760
        %1289 = vmatmul.mubr.f32.gmra.mrb[0].mxu0 %v1288
        %v1290 = vpop.f32.mrb[0].mxu0
        %v1291 = vadd.f32 %v1177, %v1290
        %v1292 = vpop.f32.mrb[0].mxu0
        %1293 = vmatprep.mubr.f32.mxu0 0.0
        %v1294 = vand.u32 %v836, 4294901760
        %v1295 = vsub.f32 %v836, %v1294
        %v1296 = vand.u32 %v1295, 4294901760
        %1297 = vmatmul.mubr.f32.gmra.mrb[0].mxu0 %v1296
        %v1298 = vpop.f32.mrb[0].mxu0
        %v1299 = vadd.f32 %v1184, %v1298
        %v1300 = vpop.f32.mrb[0].mxu0
        %1301 = vdwg.mxu0
        %1302 = vmatprep.subr.mxu0 0.0
        %v1303 = vand.u32 %v820, 4294901760
        %v1304 = vsub.f32 %v820, %v1303
        %v1305 = vand.u32 %v1304, 4294901760
        %1306 = vmatpush1.msra.mxu0 %v1305
        %1307 = vmatprep.subr.mxu0 0.0
        %v1308 = vand.u32 %v821, 4294901760
        %v1309 = vsub.f32 %v821, %v1308
        %v1310 = vand.u32 %v1309, 4294901760
        %1311 = vmatpush1.msra.mxu0 %v1310
        %1312 = vmatprep.subr.mxu0 0.0
        %1313 = vmatpush1.msra.mxu0 0.0
        %1314 = vmatprep.subr.mxu0 0.0
        %1315 = vmatpush1.msra.mxu0 0.0
        %1316 = vmatprep.subr.mxu0 0.0
        %1317 = vmatpush1.msra.mxu0 0.0
        %1318 = vmatprep.subr.mxu0 0.0
        %1319 = vmatpush1.msra.mxu0 0.0
        %1320 = vmatprep.subr.mxu0 0.0
        %1321 = vmatpush1.msra.mxu0 0.0
        %1322 = vmatprep.subr.mxu0 0.0
        %1323 = vmatpush1.msra.mxu0 0.0
        %1324 = vmatprep.subr.mxu0 0.0
        %1325 = vmatpush1.msra.mxu0 0.0
        %1326 = vmatprep.subr.mxu0 0.0
        %1327 = vmatpush1.msra.mxu0 0.0
        %1328 = vmatprep.subr.mxu0 0.0
        %1329 = vmatpush1.msra.mxu0 0.0
        %1330 = vmatprep.subr.mxu0 0.0
        %1331 = vmatpush1.msra.mxu0 0.0
        %1332 = vmatprep.subr.mxu0 0.0
        %1333 = vmatpush1.msra.mxu0 0.0
        %1334 = vmatprep.subr.mxu0 0.0
        %1335 = vmatpush1.msra.mxu0 0.0
        %1336 = vmatprep.subr.mxu0 0.0
        %1337 = vmatpush1.msra.mxu0 0.0
        %1338 = vmatprep.subr.mxu0 0.0
        %1339 = vmatpush1.msra.mxu0 0.0
        %1340 = vmatprep.subr.mxu0 0.0
        %1341 = vmatpush1.msra.mxu0 0.0
        %1342 = vmatprep.subr.mxu0 0.0
        %1343 = vmatpush1.msra.mxu0 0.0
        %1344 = vmatprep.subr.mxu0 0.0
        %1345 = vmatpush1.msra.mxu0 0.0
        %1346 = vmatprep.subr.mxu0 0.0
        %1347 = vmatpush1.msra.mxu0 0.0
        %1348 = vmatprep.subr.mxu0 0.0
        %1349 = vmatpush1.msra.mxu0 0.0
        %1350 = vmatprep.subr.mxu0 0.0
        %1351 = vmatpush1.msra.mxu0 0.0
        %1352 = vmatprep.subr.mxu0 0.0
        %1353 = vmatpush1.msra.mxu0 0.0
        %1354 = vmatprep.subr.mxu0 0.0
        %1355 = vmatpush1.msra.mxu0 0.0
        %1356 = vmatprep.subr.mxu0 0.0
        %1357 = vmatpush1.msra.mxu0 0.0
        %1358 = vmatprep.subr.mxu0 0.0
        %1359 = vmatpush1.msra.mxu0 0.0
        %1360 = vmatprep.subr.mxu0 0.0
        %1361 = vmatpush1.msra.mxu0 0.0
        %1362 = vmatprep.subr.mxu0 0.0
        %1363 = vmatpush1.msra.mxu0 0.0
        %1364 = vmatprep.subr.mxu0 0.0
        %1365 = vmatpush1.msra.mxu0 0.0
        %1366 = vmatprep.subr.mxu0 0.0
        %1367 = vmatpush1.msra.mxu0 0.0
        %1368 = vmatprep.subr.mxu0 0.0
        %1369 = vmatpush1.msra.mxu0 0.0
        %1370 = vmatprep.subr.mxu0 0.0
        %1371 = vmatpush1.msra.mxu0 0.0
        %1372 = vmatprep.mubr.f32.mxu0 0.0
        %v1373 = vand.u32 %v823, 4294901760
        %1374 = vmatmul.mubr.f32.gmra.mrb[0].mxu0 %v1373
        %v1375 = vpop.f32.mrb[0].mxu0
        %v1376 = vadd.f32 %v1259, %v1375
        %v1377 = vpop.f32.mrb[0].mxu0
        %1378 = vmatprep.mubr.f32.mxu0 0.0
        %v1379 = vand.u32 %v826, 4294901760
        %1380 = vmatmul.mubr.f32.gmra.mrb[0].mxu0 %v1379
        %v1381 = vpop.f32.mrb[0].mxu0
        %v1382 = vadd.f32 %v1267, %v1381
        %v1383 = vpop.f32.mrb[0].mxu0
        %1384 = vmatprep.mubr.f32.mxu0 0.0
        %v1385 = vand.u32 %v828, 4294901760
        %1386 = vmatmul.mubr.f32.gmra.mrb[0].mxu0 %v1385
        %v1387 = vpop.f32.mrb[0].mxu0
        %v1388 = vadd.f32 %v1275, %v1387
        %v1389 = vpop.f32.mrb[0].mxu0
        %1390 = vmatprep.mubr.f32.mxu0 0.0
        %v1391 = vand.u32 %v830, 4294901760
        %1392 = vmatmul.mubr.f32.gmra.mrb[0].mxu0 %v1391
        %v1393 = vpop.f32.mrb[0].mxu0
        %v1394 = vadd.f32 %v1283, %v1393
        %v1395 = vpop.f32.mrb[0].mxu0
        %1396 = vmatprep.mubr.f32.mxu0 0.0
        %v1397 = vand.u32 %v833, 4294901760
        %1398 = vmatmul.mubr.f32.gmra.mrb[0].mxu0 %v1397
        %v1399 = vpop.f32.mrb[0].mxu0
        %v1400 = vadd.f32 %v1291, %v1399
        %v1401 = vpop.f32.mrb[0].mxu0
        %1402 = vmatprep.mubr.f32.mxu0 0.0
        %v1403 = vand.u32 %v836, 4294901760
        %1404 = vmatmul.mubr.f32.gmra.mrb[0].mxu0 %v1403
        %v1405 = vpop.f32.mrb[0].mxu0
        %v1406 = vadd.f32 %v1299, %v1405
        %v1407 = vpop.f32.mrb[0].mxu0
        %1408 = vdwg.mxu0
        %1409 = vmatprep.subr.mxu0 0.0
        %v1410 = vand.u32 %v820, 4294901760
        %1411 = vmatpush1.msra.mxu0 %v1410
        %1412 = vmatprep.subr.mxu0 0.0
        %v1413 = vand.u32 %v821, 4294901760
        %1414 = vmatpush1.msra.mxu0 %v1413
        %1415 = vmatprep.subr.mxu0 0.0
        %1416 = vmatpush1.msra.mxu0 0.0
        %1417 = vmatprep.subr.mxu0 0.0
        %1418 = vmatpush1.msra.mxu0 0.0
        %1419 = vmatprep.subr.mxu0 0.0
        %1420 = vmatpush1.msra.mxu0 0.0
        %1421 = vmatprep.subr.mxu0 0.0
        %1422 = vmatpush1.msra.mxu0 0.0
        %1423 = vmatprep.subr.mxu0 0.0
        %1424 = vmatpush1.msra.mxu0 0.0
        %1425 = vmatprep.subr.mxu0 0.0
        %1426 = vmatpush1.msra.mxu0 0.0
        %1427 = vmatprep.subr.mxu0 0.0
        %1428 = vmatpush1.msra.mxu0 0.0
        %1429 = vmatprep.subr.mxu0 0.0
        %1430 = vmatpush1.msra.mxu0 0.0
        %1431 = vmatprep.subr.mxu0 0.0
        %1432 = vmatpush1.msra.mxu0 0.0
        %1433 = vmatprep.subr.mxu0 0.0
        %1434 = vmatpush1.msra.mxu0 0.0
        %1435 = vmatprep.subr.mxu0 0.0
        %1436 = vmatpush1.msra.mxu0 0.0
        %1437 = vmatprep.subr.mxu0 0.0
        %1438 = vmatpush1.msra.mxu0 0.0
        %1439 = vmatprep.subr.mxu0 0.0
        %1440 = vmatpush1.msra.mxu0 0.0
        %1441 = vmatprep.subr.mxu0 0.0
        %1442 = vmatpush1.msra.mxu0 0.0
        %1443 = vmatprep.subr.mxu0 0.0
        %1444 = vmatpush1.msra.mxu0 0.0
        %1445 = vmatprep.subr.mxu0 0.0
        %1446 = vmatpush1.msra.mxu0 0.0
        %1447 = vmatprep.subr.mxu0 0.0
        %1448 = vmatpush1.msra.mxu0 0.0
        %1449 = vmatprep.subr.mxu0 0.0
        %1450 = vmatpush1.msra.mxu0 0.0
        %1451 = vmatprep.subr.mxu0 0.0
        %1452 = vmatpush1.msra.mxu0 0.0
        %1453 = vmatprep.subr.mxu0 0.0
        %1454 = vmatpush1.msra.mxu0 0.0
        %1455 = vmatprep.subr.mxu0 0.0
        %1456 = vmatpush1.msra.mxu0 0.0
        %1457 = vmatprep.subr.mxu0 0.0
        %1458 = vmatpush1.msra.mxu0 0.0
        %1459 = vmatprep.subr.mxu0 0.0
        %1460 = vmatpush1.msra.mxu0 0.0
        %1461 = vmatprep.subr.mxu0 0.0
        %1462 = vmatpush1.msra.mxu0 0.0
        %1463 = vmatprep.subr.mxu0 0.0
        %1464 = vmatpush1.msra.mxu0 0.0
        %1465 = vmatprep.subr.mxu0 0.0
        %1466 = vmatpush1.msra.mxu0 0.0
        %1467 = vmatprep.subr.mxu0 0.0
        %1468 = vmatpush1.msra.mxu0 0.0
        %1469 = vmatprep.subr.mxu0 0.0
        %1470 = vmatpush1.msra.mxu0 0.0
        %1471 = vmatprep.subr.mxu0 0.0
        %1472 = vmatpush1.msra.mxu0 0.0
        %1473 = vmatprep.subr.mxu0 0.0
        %1474 = vmatpush1.msra.mxu0 0.0
        %1475 = vmatprep.mubr.f32.mxu0 0.0
        %v1476 = vand.u32 %v823, 4294901760
        %1477 = vmatmul.mubr.f32.gmra.mrb[0].mxu0 %v1476
        %v1478 = vpop.f32.mrb[0].mxu0
        %v1479 = vadd.f32 %v1376, %v1478
        %v1480 = vpop.f32.mrb[0].mxu0
        %1481 = vmatprep.mubr.f32.mxu0 0.0
        %v1482 = vand.u32 %v826, 4294901760
        %1483 = vmatmul.mubr.f32.gmra.mrb[0].mxu0 %v1482
        %v1484 = vpop.f32.mrb[0].mxu0
        %v1485 = vadd.f32 %v1382, %v1484
        %v1486 = vpop.f32.mrb[0].mxu0
        %1487 = vmatprep.mubr.f32.mxu0 0.0
        %v1488 = vand.u32 %v828, 4294901760
        %1489 = vmatmul.mubr.f32.gmra.mrb[0].mxu0 %v1488
        %v1490 = vpop.f32.mrb[0].mxu0
        %v1491 = vadd.f32 %v1388, %v1490
        %v1492 = vpop.f32.mrb[0].mxu0
        %1493 = vmatprep.mubr.f32.mxu0 0.0
        %v1494 = vand.u32 %v830, 4294901760
        %1495 = vmatmul.mubr.f32.gmra.mrb[0].mxu0 %v1494
        %v1496 = vpop.f32.mrb[0].mxu0
        %v1497 = vadd.f32 %v1394, %v1496
        %v1498 = vpop.f32.mrb[0].mxu0
        %1499 = vmatprep.mubr.f32.mxu0 0.0
        %v1500 = vand.u32 %v833, 4294901760
        %1501 = vmatmul.mubr.f32.gmra.mrb[0].mxu0 %v1500
        %v1502 = vpop.f32.mrb[0].mxu0
        %v1503 = vadd.f32 %v1400, %v1502
        %v1504 = vpop.f32.mrb[0].mxu0
        %1505 = vmatprep.mubr.f32.mxu0 0.0
        %v1506 = vand.u32 %v836, 4294901760
        %1507 = vmatmul.mubr.f32.gmra.mrb[0].mxu0 %v1506
        %v1508 = vpop.f32.mrb[0].mxu0
        %v1509 = vadd.f32 %v1406, %v1508
        %v1510 = vpop.f32.mrb[0].mxu0
        %1511 = vdwg.mxu0
        %v1515 = vrot.slane %v1479, 3
        %v1516 = vrot.slane %v1491, 3
        %v1517 = vrot.slane %v1503, 3
        %v1521 = vrot.slane %v1479, 1
        %v1522 = vrot.slane %v1491, 1
        %v1523 = vrot.slane %v1503, 1
        %v1527 = vrot.slane %v1479, 7
        %v1528 = vrot.slane %v1491, 7
        %v1529 = vrot.slane %v1503, 7
        %vm1536 = vcmask 1042432
        %v1537 = vrot.slane %v1479, 5
        %v1538 = vrot.slane %v1485, 5
        %v1539 = vsel %vm1536, %v1537, %v1538
        %v1540 = vrot.slane %v1491, 5
        %v1541 = vrot.slane %v1497, 5
        %v1542 = vsel %vm1536, %v1540, %v1541
        %v1543 = vrot.slane %v1503, 5
        %v1544 = vrot.slane %v1509, 5
        %v1545 = vsel %vm1536, %v1543, %v1544
        %v1555 = vrot.slane %v1485, 3
        %v1556 = vrot.slane %v1497, 3
        %v1557 = vrot.slane %v1509, 3
        %v1561 = vrot.slane %v1485, 1
        %v1562 = vrot.slane %v1497, 1
        %v1563 = vrot.slane %v1509, 1
        %v1567 = vrot.slane %v1485, 7
        %v1568 = vrot.slane %v1497, 7
        %v1569 = vrot.slane %v1509, 7
        %v1573 = vsel %vm733, %v1515, %v1521
        %v1574 = vsel %vm733, %v1516, %v1522
        %v1575 = vsel %vm733, %v1517, %v1523
        %v1576 = vsel %vm774, %v1573, %v1527
        %v1577 = vsel %vm774, %v1574, %v1528
        %v1578 = vsel %vm774, %v1575, %v1529
        %v1579 = vsel %vm1536, %v1576, %v1537
        %v1580 = vsel %vm1536, %v1577, %v1540
        %v1581 = vsel %vm1536, %v1578, %v1543
        %v1582 = vsel %vm1536, %v1538, %v1555
        %v1583 = vsel %vm1536, %v1541, %v1556
        %v1584 = vsel %vm1536, %v1544, %v1557
        %vm1585 = vcmask 1043456
        %v1586 = vsel %vm1585, %v1582, %v1561
        %v1587 = vsel %vm1585, %v1583, %v1562
        %v1588 = vsel %vm1585, %v1584, %v1563
        %vm1589 = vcmask 1044480
        %v1590 = vsel %vm1589, %v1586, %v1567
        %v1591 = vsel %vm1589, %v1587, %v1568
        %v1592 = vsel %vm1589, %v1588, %v1569
        %v1593 = vmul.f32 %v1579, 0.39905027
        %v1594 = vmul.f32 %v1539, 0.39905027
        %v1595 = vmul.f32 %v1590, 0.39905027
        %v1596 = vmul.f32 %v1580, 0.39905027
        %v1597 = vmul.f32 %v1542, 0.39905027
        %v1598 = vmul.f32 %v1591, 0.39905027
        %v1599 = vmul.f32 %v1581, 0.39905027
        %v1600 = vmul.f32 %v1545, 0.39905027
        %v1601 = vmul.f32 %v1592, 0.39905027
        %v1608 = vrot.slane %v1579, 6
        %v1609 = vrot.slane %v1539, 6
        %v1610 = vsel %vm774, %v1608, %v1609
        %v1611 = vrot.slane %v1590, 6
        %v1612 = vsel %vm774, %v1609, %v1611
        %v1613 = vrot.slane %v1580, 6
        %v1614 = vrot.slane %v1542, 6
        %v1615 = vsel %vm774, %v1613, %v1614
        %v1616 = vrot.slane %v1591, 6
        %v1617 = vsel %vm774, %v1614, %v1616
        %v1618 = vrot.slane %v1581, 6
        %v1619 = vrot.slane %v1545, 6
        %v1620 = vsel %vm774, %v1618, %v1619
        %v1621 = vrot.slane %v1592, 6
        %v1622 = vsel %vm774, %v1619, %v1621
        %v1629 = vadd.f32 %v1579, %v1610
        %v1630 = vadd.f32 %v1539, %v1612
        %v1631 = vadd.f32 %v1580, %v1615
        %v1632 = vadd.f32 %v1542, %v1617
        %v1633 = vadd.f32 %v1581, %v1620
        %v1634 = vadd.f32 %v1545, %v1622
        %v1635 = vmul.f32 %v1629, 0.004433048
        %v1636 = vmul.f32 %v1630, 0.004433048
        %v1637 = vmul.f32 %v1631, 0.004433048
        %v1638 = vmul.f32 %v1632, 0.004433048
        %v1639 = vmul.f32 %v1633, 0.004433048
        %v1640 = vmul.f32 %v1634, 0.004433048
        %v1647 = vrot.slane %v1635, 5
        %v1648 = vrot.slane %v1636, 5
        %v1649 = vsel %vm1536, %v1647, %v1648
        %v1650 = vrot.slane %v1637, 5
        %v1651 = vrot.slane %v1638, 5
        %v1652 = vsel %vm1536, %v1650, %v1651
        %v1653 = vrot.slane %v1639, 5
        %v1654 = vrot.slane %v1640, 5
        %v1655 = vsel %vm1536, %v1653, %v1654
        %v1665 = vadd.f32 %v1593, %v1647
        %v1666 = vadd.f32 %v1594, %v1649
        %v1667 = vadd.f32 %v1595, %v1648
        %v1668 = vadd.f32 %v1596, %v1650
        %v1669 = vadd.f32 %v1597, %v1652
        %v1670 = vadd.f32 %v1598, %v1651
        %v1671 = vadd.f32 %v1599, %v1653
        %v1672 = vadd.f32 %v1600, %v1655
        %v1673 = vadd.f32 %v1601, %v1654
        %v1674 = vrot.slane %v1579, 4
        %v1675 = vrot.slane %v1539, 4
        %v1676 = vsel %vm1585, %v1674, %v1675
        %v1677 = vrot.slane %v1590, 4
        %v1678 = vsel %vm1585, %v1675, %v1677
        %v1679 = vrot.slane %v1580, 4
        %v1680 = vrot.slane %v1542, 4
        %v1681 = vsel %vm1585, %v1679, %v1680
        %v1682 = vrot.slane %v1591, 4
        %v1683 = vsel %vm1585, %v1680, %v1682
        %v1684 = vrot.slane %v1581, 4
        %v1685 = vrot.slane %v1545, 4
        %v1686 = vsel %vm1585, %v1684, %v1685
        %v1687 = vrot.slane %v1592, 4
        %v1688 = vsel %vm1585, %v1685, %v1687
        %v1698 = vadd.f32 %v1579, %v1676
        %v1699 = vadd.f32 %v1539, %v1678
        %v1700 = vadd.f32 %v1590, %v1677
        %v1701 = vadd.f32 %v1580, %v1681
        %v1702 = vadd.f32 %v1542, %v1683
        %v1703 = vadd.f32 %v1591, %v1682
        %v1704 = vadd.f32 %v1581, %v1686
        %v1705 = vadd.f32 %v1545, %v1688
        %v1706 = vadd.f32 %v1592, %v1687
        %v1707 = vmul.f32 %v1698, 0.054005582
        %v1708 = vmul.f32 %v1699, 0.054005582
        %v1709 = vmul.f32 %v1700, 0.054005582
        %v1710 = vmul.f32 %v1701, 0.054005582
        %v1711 = vmul.f32 %v1702, 0.054005582
        %v1712 = vmul.f32 %v1703, 0.054005582
        %v1713 = vmul.f32 %v1704, 0.054005582
        %v1714 = vmul.f32 %v1705, 0.054005582
        %v1715 = vmul.f32 %v1706, 0.054005582
        %v1725 = vrot.slane %v1707, 6
        %v1726 = vrot.slane %v1708, 6
        %v1727 = vsel %vm774, %v1725, %v1726
        %v1728 = vrot.slane %v1709, 6
        %v1729 = vsel %vm774, %v1726, %v1728
        %v1730 = vrot.slane %v1710, 6
        %v1731 = vrot.slane %v1711, 6
        %v1732 = vsel %vm774, %v1730, %v1731
        %v1733 = vrot.slane %v1712, 6
        %v1734 = vsel %vm774, %v1731, %v1733
        %v1735 = vrot.slane %v1713, 6
        %v1736 = vrot.slane %v1714, 6
        %v1737 = vsel %vm774, %v1735, %v1736
        %v1738 = vrot.slane %v1715, 6
        %v1739 = vsel %vm774, %v1736, %v1738
        %v1749 = vadd.f32 %v1665, %v1725
        %v1750 = vadd.f32 %v1666, %v1727
        %v1751 = vadd.f32 %v1667, %v1729
        %v1752 = vadd.f32 %v1668, %v1730
        %v1753 = vadd.f32 %v1669, %v1732
        %v1754 = vadd.f32 %v1670, %v1734
        %v1755 = vadd.f32 %v1671, %v1735
        %v1756 = vadd.f32 %v1672, %v1737
        %v1757 = vadd.f32 %v1673, %v1739
        %v1758 = vrot.slane %v1579, 2
        %v1759 = vrot.slane %v1539, 2
        %v1760 = vsel %vm762, %v1758, %v1759
        %v1761 = vrot.slane %v1590, 2
        %v1762 = vsel %vm762, %v1759, %v1761
        %v1763 = vrot.slane %v1580, 2
        %v1764 = vrot.slane %v1542, 2
        %v1765 = vsel %vm762, %v1763, %v1764
        %v1766 = vrot.slane %v1591, 2
        %v1767 = vsel %vm762, %v1764, %v1766
        %v1768 = vrot.slane %v1581, 2
        %v1769 = vrot.slane %v1545, 2
        %v1770 = vsel %vm762, %v1768, %v1769
        %v1771 = vrot.slane %v1592, 2
        %v1772 = vsel %vm762, %v1769, %v1771
        %v1782 = vadd.f32 %v1579, %v1760
        %v1783 = vadd.f32 %v1539, %v1762
        %v1784 = vadd.f32 %v1590, %v1761
        %v1785 = vadd.f32 %v1580, %v1765
        %v1786 = vadd.f32 %v1542, %v1767
        %v1787 = vadd.f32 %v1591, %v1766
        %v1788 = vadd.f32 %v1581, %v1770
        %v1789 = vadd.f32 %v1545, %v1772
        %v1790 = vadd.f32 %v1592, %v1771
        %v1791 = vmul.f32 %v1782, 0.24203622
        %v1792 = vmul.f32 %v1783, 0.24203622
        %v1793 = vmul.f32 %v1784, 0.24203622
        %v1794 = vmul.f32 %v1785, 0.24203622
        %v1795 = vmul.f32 %v1786, 0.24203622
        %v1796 = vmul.f32 %v1787, 0.24203622
        %v1797 = vmul.f32 %v1788, 0.24203622
        %v1798 = vmul.f32 %v1789, 0.24203622
        %v1799 = vmul.f32 %v1790, 0.24203622
        %v1809 = vrot.slane %v1791, 7
        %v1810 = vrot.slane %v1792, 7
        %v1811 = vsel %vm733, %v1809, %v1810
        %v1812 = vrot.slane %v1793, 7
        %v1813 = vsel %vm733, %v1810, %v1812
        %v1814 = vrot.slane %v1794, 7
        %v1815 = vrot.slane %v1795, 7
        %v1816 = vsel %vm733, %v1814, %v1815
        %v1817 = vrot.slane %v1796, 7
        %v1818 = vsel %vm733, %v1815, %v1817
        %v1819 = vrot.slane %v1797, 7
        %v1820 = vrot.slane %v1798, 7
        %v1821 = vsel %vm733, %v1819, %v1820
        %v1822 = vrot.slane %v1799, 7
        %v1823 = vsel %vm733, %v1820, %v1822
        %v1833 = vadd.f32 %v1749, %v1809
        %v1834 = vadd.f32 %v1750, %v1811
        %v1835 = vadd.f32 %v1751, %v1813
        %v1836 = vadd.f32 %v1752, %v1814
        %v1837 = vadd.f32 %v1753, %v1816
        %v1838 = vadd.f32 %v1754, %v1818
        %v1839 = vadd.f32 %v1755, %v1819
        %v1840 = vadd.f32 %v1756, %v1821
        %v1841 = vadd.f32 %v1757, %v1823
        %v1842 = vmul.f32 %v1833, %v1836
        %v1843 = vmul.f32 %v1834, %v1837
        %v1844 = vmul.f32 %v1835, %v1838
        %v1845 = vmul.f32 %v1839, %v1839
        %v1846 = vmul.f32 %v1840, %v1840
        %v1847 = vmul.f32 %v1841, %v1841
        %v1848 = vsub.f32 %v1842, %v1845
        %v1849 = vsub.f32 %v1843, %v1846
        %v1850 = vsub.f32 %v1844, %v1847
        %v1851 = vadd.f32 %v1833, %v1836
        %v1852 = vadd.f32 %v1834, %v1837
        %v1853 = vadd.f32 %v1835, %v1838
        %v1854 = vmul.f32 %v1851, %v1851
        %v1855 = vmul.f32 %v1852, %v1852
        %v1856 = vmul.f32 %v1853, %v1853
        %v1857 = vmul.f32 %v1854, 0.04
        %v1858 = vmul.f32 %v1855, 0.04
        %v1859 = vmul.f32 %v1856, 0.04
        %v1860 = vsub.f32 %v1848, %v1857
        %v1861 = vsub.f32 %v1849, %v1858
        %v1862 = vsub.f32 %v1850, %v1859
        %vm1863 = vcmask 130051
        %1864 = vst.msk [vmem:[%s217 - $0x3] sm:$0xf8] %vm1863, %v1860
        %1865 = vst.msk [vmem:[%s217 + $0x5] sm:$0xff] %vm222, %v1861
        %vm1866 = vcmask 124928
        %1867 = vst.msk [vmem:[%s217 + $0xd] sm:$0x7] %vm1866, %v1862
        %s1868 = sand.u32 %s97, 1
        %s1869 = scalar_lea.sflag [#allocation4], %s1868
        %s1870 = sand.u32 %s97, 1
        %s1871 = smul.addr %s1870, 16
        %s1872 = scalar_lea.vmem [#allocation8], %s1871
        // Predicated region
        $region45: #{tpu_custom_call.1} parent=31 // pred_check
          %p1873 = pneg %p107
        $region46: #{tpu_custom_call.1} parent=31 // pred_check_branch
          %1875 = sbr.rel (%p1873) target = $region48
        $region47: #{tpu_custom_call.1} parent=31 // pred_region
          %s1877 = ssub.s32 256, 256
          %1878 = vsyncadd %s1869, %s1877
          %s1879 = smul.addr %s21, 2
          %s1880 = smul.addr %s1879, 128
          %s1881 = scalar_lea.hbm %s3, %s1880
          %s1882 = sshll.u32 %s1872, 4
          %s1883 = int_to_ptr.vmem [resolvable:$true] %s1882
          %1888 = dma.vmem_to_hbm [thread:$0]  %s1883, 256, %s1881, %s1869, 128, 128, 8
        $region48: #{tpu_custom_call.1} parent=31 // pred_fallthru
          _
      $region32: #{tpu_custom_call.1} parent=5 // pred_fallthru
        _
      %p1889 = scmp.le.s32.totalorder 2, %s16
      // Predicated region
      $region49: #{tpu_custom_call.1} parent=5 // pred_check
        %p1890 = pneg %p1889
      $region50: #{tpu_custom_call.1} parent=5 // pred_check_branch
        %1892 = sbr.rel (%p1890) target = $region52
      $region51: #{tpu_custom_call.1} parent=5 // pred_region
        %s1893 = ssub.s32 %s16, 2
        // Predicated region
        $region53: #{tpu_custom_call.1} parent=51 // pred_check
          %p1894 = pneg %p113
        $region54: #{tpu_custom_call.1} parent=51 // pred_check_branch
          %1896 = sbr.rel (%p1894) target = $region56
        $region55: #{tpu_custom_call.1} parent=51 // pred_region
          %s1897 = sand.u32 %s98, 1
          %s1898 = scalar_lea.sflag [#allocation4], %s1897
          %s1899 = sand.u32 %s98, 1
          %s1900 = smul.addr %s1899, 16
          %s1901 = scalar_lea.vmem [#allocation8], %s1900
          %1902 = dma.done %s1898, 256
        $region56: #{tpu_custom_call.1} parent=51 // pred_fallthru
          _
      $region52: #{tpu_custom_call.1} parent=5 // pred_fallthru
        _
    $region6: #{tpu_custom_call.1} parent=1 // loop_footer
      %s20 = sadd.s32 1, %s16
    $region7: #{tpu_custom_call.1} parent=1 // loop_footer_branch
      %15 = sbr.rel target = $region3
    $region8: #{tpu_custom_call.1} parent=1 // loop_exit
      _
    %1903 = vsyncpa [#allocation3], 1
    %s1904 = scalar_lea.sflag [#allocation3], 1
    %1905 = vsyncpa %s1904, 1
    %1906 = vsyncpa [#allocation6], 1
    %1907 = vsyncpa [#allocation4], 1
    %s1908 = scalar_lea.sflag [#allocation4], 1
    %1909 = vsyncpa %s1908, 1

</llo_original>
